<compile_context>
chip_gen: v7x
topology: tpu7x:2x2x1
jax: 0.10.0
libtpu: 0.0.40
codegen_flags: <defaults>
</compile_context>

<pallas_src>
import jax
import jax.numpy as jnp
from jax.experimental import pallas as pl
from jax.experimental.pallas import tpu as pltpu


def _round_up(x, m):
    return ((x + m - 1) // m) * m


def _pick_tile_n(N, tile_n):
    """Lane-aligned column tile; keep >=2 grid steps so v7x megacore shards."""
    if N <= 128:
        return N  # single full-extent block
    tile_n = max(128, min(tile_n, _round_up(N, 128)))
    tile_n = _round_up(tile_n, 128)
    if tile_n >= N and N > 256:
        tile_n = _round_up(pl.cdiv(N, 2), 128)
    return tile_n


def rgbnet_kernel(x_ref, w_hd_t_ref, b2_ref, w3_t_ref, b3_ref, o_ref):
    # x_ref:     (H + D_in, tile_n)   packed [h; d], feature-major, lane-dense
    # w_hd_t:    (H//2, H + D_in)     fused first-layer weight (transposed), f32
    # b2:        (H//2, 1)            fused bias, f32
    # w3_t:      (D_out, H//2)        rgb weight (transposed), f32
    # b3:        (D_out, 1)           rgb bias, f32
    # o_ref:     (D_out, tile_n)
    #
    # hid = relu(W_hd^T @ [h; d] + b2')  -- MXU accumulates in f32; bias-add
    # and ReLU stay on the f32 accumulator (no bf16 VPU math; v5e-safe).
    hid = jnp.dot(w_hd_t_ref[...], x_ref[...],
                  preferred_element_type=jnp.float32) + b2_ref[...]
    hid = jnp.maximum(hid, 0.0)

    # rgb = W3^T @ hid + b3  (both operands f32 -> no avoidable precision loss)
    rgb = jnp.dot(w3_t_ref[...], hid,
                  preferred_element_type=jnp.float32) + b3_ref[...]
    o_ref[...] = rgb.astype(o_ref.dtype)


def fuse_params(params, *, weight_dtype=jnp.float32):
    """Fold feature_mlp into views_mlp[0]; return feature-major operands.

    `params` = (w1, b1, w2, b2, w3, b3), nn.Linear weights in (in, out) layout,
    f32.  Weights are kept in f32 by default (tiny, constant-index blocks).
    """
    w1, b1, w2, b2, w3, b3 = params
    H = w1.shape[0]
    w2h, w2d = w2[:H], w2[H:]
    w12 = w1 @ w2h                                    # (H, H//2), fused in f32
    b2f = b1 @ w2h + b2                               # (H//2,)
    w_hd = jnp.concatenate([w12, w2d], axis=0)        # (H + D_in, H//2)
    return (jnp.asarray(w_hd.T, weight_dtype),        # (H//2, H + D_in)
            jnp.asarray(b2f, jnp.float32)[:, None],   # (H//2, 1)
            jnp.asarray(w3.T, weight_dtype),          # (D_out, H//2)
            jnp.asarray(b3, jnp.float32)[:, None])    # (D_out, 1)


def rgbnet_forward_packed(x_t, fused_params, *, tile_n=16384,
                          out_dtype=jnp.bfloat16):
    """Fast path.  x_t: (H + D_in, N) = concat([h, d], -1)^T, any float dtype
    (bf16 preferred from the producer).  Returns rgb^T: (D_out, N)."""
    K, N = x_t.shape
    w_hd_t, b2f, w3_t, b3 = fused_params
    H_half = w_hd_t.shape[0]
    D_out = w3_t.shape[0]
    assert w_hd_t.shape[1] == K

    tile_n = _pick_tile_n(N, tile_n)
    grid = (pl.cdiv(N, tile_n),)

    return pl.pallas_call(
        rgbnet_kernel,
        out_shape=jax.ShapeDtypeStruct((D_out, N), out_dtype),
        grid_spec=pltpu.PrefetchScalarGridSpec(
            num_scalar_prefetch=0,
            grid=grid,
            in_specs=[
                pl.BlockSpec((K, tile_n), lambda i: (0, i)),      # x_t stream
                pl.BlockSpec((H_half, K), lambda i: (0, 0)),      # W_hd^T const
                pl.BlockSpec((H_half, 1), lambda i: (0, 0)),      # b2'   const
                pl.BlockSpec((D_out, H_half), lambda i: (0, 0)),  # W3^T  const
                pl.BlockSpec((D_out, 1), lambda i: (0, 0)),       # b3    const
            ],
            out_specs=pl.BlockSpec((D_out, tile_n), lambda i: (0, i)),
        ),
        compiler_params=pltpu.CompilerParams(
            dimension_semantics=("parallel",),     # megacore-shardable on v7x
            vmem_limit_bytes=48 * 1024 * 1024,     # above v5e's 16 MiB default,
        ),                                         # below v7x's 64 MiB physical
    )(x_t, w_hd_t, b2f, w3_t, b3)


def rgbnet_forward(h, d, fused_params, *, tile_n=16384, out_dtype=jnp.bfloat16):
    """Row-major convenience API matching RgbNet.forward(h, d).

    h: [N, H], d: [N, D_in] -> rgb: [N, D_out].  This packs [h | d] into the
    lane-dense feature-major layout with one extra XLA pass; producers that
    can write the (H + D_in, N) stream directly should call
    rgbnet_forward_packed instead (saves an HBM round trip).
    No dtype casts are inserted here (review: stream the caller's dtype).
    """
    x_t = jnp.concatenate([h, d], axis=-1).T
    rgb_t = rgbnet_forward_packed(x_t, fused_params, tile_n=tile_n,
                                  out_dtype=out_dtype)
    return rgb_t.T


def init_params(key, dim_in, dim_out, dim_hidden):
    """Deterministic synthetic params; nn.Linear weights stored as (in, out)."""
    ks = jax.random.split(key, 6)

    def lin(kw, kb, fan_in, fan_out):
        bound = 1.0 / jnp.sqrt(fan_in)
        w = jax.random.uniform(kw, (fan_in, fan_out), jnp.float32, -bound, bound)
        b = jax.random.uniform(kb, (fan_out,), jnp.float32, -bound, bound)
        return w, b

    w1, b1 = lin(ks[0], ks[1], dim_hidden, dim_hidden)                 # feature_mlp
    w2, b2 = lin(ks[2], ks[3], dim_hidden + dim_in, dim_hidden // 2)   # views_mlp[0]
    w3, b3 = lin(ks[4], ks[5], dim_hidden // 2, dim_out)               # rgb_mlp
    return w1, b1, w2, b2, w3, b3


def rgbnet_reference(h, d, params):
    """Unfused f32 reference, mirrors the PyTorch forward exactly."""
    w1, b1, w2, b2, w3, b3 = params
    feature = h @ w1 + b1
    cat = jnp.concatenate([feature, d], axis=-1)
    v = jnp.maximum(cat @ w2 + b2, 0.0)
    return v @ w3 + b3


if __name__ == "__main__":
    dim_in, dim_out, dim_hidden, num_layers = 4, 3, 32, 2
    N = 4096  # sample points; tile picker keeps >= 2 grid steps here

    key = jax.random.PRNGKey(0)
    k_h, k_d, k_p = jax.random.split(key, 3)
    h = jax.random.normal(k_h, (N, dim_hidden), jnp.float32)
    d = jax.random.normal(k_d, (N, dim_in), jnp.float32)
    params = init_params(k_p, dim_in, dim_out, dim_hidden)

    fused = fuse_params(params)  # one-time host-side fusion / packing (f32)

    # Fast path: producer-written packed, lane-dense bf16 stream (H+D_in, N).
    x_t = jnp.concatenate([h, d], axis=-1).T.astype(jnp.bfloat16)
    rgb_t = jax.block_until_ready(rgbnet_forward_packed(x_t, fused))
    rgb = rgb_t.T.astype(jnp.float32)

    ref = rgbnet_reference(h, d, params)  # f32, unfused
    assert rgb.shape == (N, dim_out)
    err = float(jnp.max(jnp.abs(rgb - ref)))
    assert jnp.allclose(rgb, ref, atol=2e-2, rtol=2e-2), err

    # Compat path: row-major f32 h/d straight in (no wrapper astype), f32 out.
    rgb2 = jax.block_until_ready(
        rgbnet_forward(h, d, fused, out_dtype=jnp.float32))
    err2 = float(jnp.max(jnp.abs(rgb2 - ref)))
    assert rgb2.shape == (N, dim_out)
    assert jnp.allclose(rgb2, ref, atol=2e-2, rtol=2e-2), err2

    print("KERNEL_OK")
</pallas_src>

<mosaic_0001>
module attributes {stable_mosaic.version = 11 : i64} {
  func.func @rgbnet_kernel(%arg0: i32, %arg1: memref<36x2048xbf16, #tpu.memory_space<vmem>>, %arg2: memref<16x36xf32, #tpu.memory_space<vmem>>, %arg3: memref<16x1xf32, #tpu.memory_space<vmem>>, %arg4: memref<3x16xf32, #tpu.memory_space<vmem>>, %arg5: memref<3x1xf32, #tpu.memory_space<vmem>>, %arg6: memref<3x2048xbf16, #tpu.memory_space<vmem>>) attributes {dimension_semantics = [#tpu.dimension_semantics<parallel>], iteration_bounds = array<i64: 2>, scalar_prefetch = 0 : i64, scratch_operands = 0 : i64, tpu.core_type = #tpu.core_type<tc>, window_params = [{transform_indices = @transform_0, window_bounds = array<i64: 36, 2048>}, {pipeline_mode = #tpu.pipeline_mode<synchronous>, transform_indices = @transform_1, window_bounds = array<i64: 16, 36>}, {pipeline_mode = #tpu.pipeline_mode<synchronous>, transform_indices = @transform_2, window_bounds = array<i64: 16, 1>}, {pipeline_mode = #tpu.pipeline_mode<synchronous>, transform_indices = @transform_3, window_bounds = array<i64: 3, 16>}, {pipeline_mode = #tpu.pipeline_mode<synchronous>, transform_indices = @transform_4, window_bounds = array<i64: 3, 1>}, {transform_indices = @transform_5, window_bounds = array<i64: 3, 2048>}]} {
    %c0 = arith.constant 0 : index
    %c0_0 = arith.constant 0 : index
    %0 = vector.load %arg2[%c0, %c0_0] : memref<16x36xf32, #tpu.memory_space<vmem>>, vector<16x36xf32>
    %c0_1 = arith.constant 0 : index
    %c0_2 = arith.constant 0 : index
    %1 = vector.load %arg1[%c0_1, %c0_2] : memref<36x2048xbf16, #tpu.memory_space<vmem>>, vector<36x2048xbf16>
    %cst = arith.constant dense<0.000000e+00> : vector<16x2048xf32>
    %2 = tpu.matmul %0, %1, %cst {dimension_numbers = #tpu.dot_dimension_numbers<[1], [0], [0], [1], [0, 0, 1, 1], [], []>} : vector<16x36xf32>, vector<36x2048xbf16>, vector<16x2048xf32> -> vector<16x2048xf32>
    %c0_3 = arith.constant 0 : index
    %c0_4 = arith.constant 0 : index
    %3 = vector.load %arg3[%c0_3, %c0_4] : memref<16x1xf32, #tpu.memory_space<vmem>>, vector<16x1xf32>
    %4 = vector.broadcast %3 : vector<16x1xf32> to vector<16x2048xf32>
    %5 = arith.addf %2, %4 : vector<16x2048xf32>
    %cst_5 = arith.constant 0.000000e+00 : f32
    %6 = vector.broadcast %cst_5 : f32 to vector<16x2048xf32>
    %7 = arith.maximumf %5, %6 : vector<16x2048xf32>
    %c0_6 = arith.constant 0 : index
    %c0_7 = arith.constant 0 : index
    %8 = vector.load %arg4[%c0_6, %c0_7] : memref<3x16xf32, #tpu.memory_space<vmem>>, vector<3x16xf32>
    %cst_8 = arith.constant dense<0.000000e+00> : vector<3x2048xf32>
    %9 = tpu.matmul %8, %7, %cst_8 {dimension_numbers = #tpu.dot_dimension_numbers<[1], [0], [0], [1], [0, 0, 1, 1], [], []>} : vector<3x16xf32>, vector<16x2048xf32>, vector<3x2048xf32> -> vector<3x2048xf32>
    %c0_9 = arith.constant 0 : index
    %c0_10 = arith.constant 0 : index
    %10 = vector.load %arg5[%c0_9, %c0_10] : memref<3x1xf32, #tpu.memory_space<vmem>>, vector<3x1xf32>
    %11 = vector.broadcast %10 : vector<3x1xf32> to vector<3x2048xf32>
    %12 = arith.addf %9, %11 : vector<3x2048xf32>
    %13 = arith.truncf %12 : vector<3x2048xf32> to vector<3x2048xbf16>
    %c0_11 = arith.constant 0 : index
    %c0_12 = arith.constant 0 : index
    %14 = vector.load %arg6[%c0_11, %c0_12] : memref<3x2048xbf16, #tpu.memory_space<vmem>>, vector<3x2048xbf16>
    tpu.vector_store %arg6[%c0_11, %c0_12], %13 {strides = array<i32>} : memref<3x2048xbf16, #tpu.memory_space<vmem>>, vector<3x2048xbf16>,
    return
  }
  func.func @transform_0(%arg0: i32) -> (i32, i32) {
    %c0_i32 = arith.constant 0 : i32
    %c0_i32_0 = arith.constant 0 : i32
    return %c0_i32, %arg0 : i32, i32
  }
  func.func @transform_1(%arg0: i32) -> (i32, i32) {
    %c0_i32 = arith.constant 0 : i32
    %c0_i32_0 = arith.constant 0 : i32
    %c0_i32_1 = arith.constant 0 : i32
    return %c0_i32, %c0_i32_0 : i32, i32
  }
  func.func @transform_2(%arg0: i32) -> (i32, i32) {
    %c0_i32 = arith.constant 0 : i32
    %c0_i32_0 = arith.constant 0 : i32
    %c0_i32_1 = arith.constant 0 : i32
    return %c0_i32, %c0_i32_0 : i32, i32
  }
  func.func @transform_3(%arg0: i32) -> (i32, i32) {
    %c0_i32 = arith.constant 0 : i32
    %c0_i32_0 = arith.constant 0 : i32
    %c0_i32_1 = arith.constant 0 : i32
    return %c0_i32, %c0_i32_0 : i32, i32
  }
  func.func @transform_4(%arg0: i32) -> (i32, i32) {
    %c0_i32 = arith.constant 0 : i32
    %c0_i32_0 = arith.constant 0 : i32
    %c0_i32_1 = arith.constant 0 : i32
    return %c0_i32, %c0_i32_0 : i32, i32
  }
  func.func @transform_5(%arg0: i32) -> (i32, i32) {
    %c0_i32 = arith.constant 0 : i32
    %c0_i32_0 = arith.constant 0 : i32
    return %c0_i32, %arg0 : i32, i32
  }
}

</mosaic_0001>

<llo_original>
// kernel: tpu_custom_call.1
$region0: #{tpu_custom_call.1}
  #allocation0 [shape = 'u32[]', space=smem, size = 0x4, offset = 0x4, fixed_abs, tag = 'smem constant byte address 0x4 - core index']
  #allocation1 [shape = 'u32[144,128]{1,0:T(1,128)}', space=vmem, size = 0x12000, scoped, tag = 'internal scratch']
  %s0 = inlined_call_operand.hbm [shape: bf16[36,4096], index: 0, kind: input, shape index: {}]
  %s1 = inlined_call_operand.vmem [shape: f32[16,36], index: 1, kind: input, shape index: {}]
  %s2 = inlined_call_operand.vmem [shape: f32[16,1], index: 2, kind: input, shape index: {}]
  %s3 = inlined_call_operand.vmem [shape: f32[3,16], index: 3, kind: input, shape index: {}]
  %s4 = inlined_call_operand.vmem [shape: f32[3,1], index: 4, kind: input, shape index: {}]
  %s5 = inlined_call_operand.hbm [shape: bf16[3,4096], index: 5, kind: output, shape index: {}]
  %s6 = sld [smem:[#allocation0]]
  $region57: #{tpu_custom_call.1} parent=0
    _
  %s8 = ssub.s32 1, %s6
  %s9 = scalar_select 0, %s8, %s6
  $region1: #{tpu_custom_call.1} parent=0
    #allocation2 [shape = 'u8[327680]{0}', space=vmem, size = 0x50000, scoped, tag = 'input window, operand 0']
    #allocation3 [shape = 's32[2]{0}', space=sflag, size = 0x8, scoped, tag = 'scoped memory for tpu_custom_call.1']
    #allocation4 [shape = 's32[2]{0}', space=sflag, size = 0x8, scoped, tag = 'scoped memory for tpu_custom_call.1']
    #allocation5 [shape = 'u8[32768]{0}', space=vmem, size = 0x8000, scoped, tag = 'output window, operand 0']
    %10 = vsyncpa [#allocation3], 0
    %s11 = scalar_lea.sflag [#allocation3], 1
    %12 = vsyncpa %s11, 0
    %13 = vsyncpa [#allocation4], 0
    %s14 = scalar_lea.sflag [#allocation4], 1
    %15 = vsyncpa %s14, 0
    loop: start=0, step=1, limit=4
    $region2: #{tpu_custom_call.1} parent=1 // loop_pre_header
      _
    $region3: #{tpu_custom_call.1} parent=1 // loop_header
      %s17 = sphi 0, %s21
      %p18 = scmp.ge.s32.totalorder %s17, 4
      %s27 = sphi 0, %s29
      %s30 = sphi 0, %s27
      %s31 = sphi 0, %s30
      %s47 = sphi 0, %s31
      %s51 = sphi 0, %s51
      %s53 = sphi 0, %s51
      %s54 = sphi 0, %s53
      %s68 = sphi 0, %s54
      %s72 = sphi 0, %s72
      %s74 = sphi 0, %s72
      %s75 = sphi 0, %s74
      %s89 = sphi 0, %s75
      %s93 = sphi 0, %s93
      %s95 = sphi 0, %s93
      %s96 = sphi 0, %s95
      %s110 = sphi 0, %s96
      %s114 = sphi 0, %s114
      %s116 = sphi 0, %s114
      %s117 = sphi 0, %s116
      %s131 = sphi 0, %s117
      %s137 = sphi 0, %s139
      %s140 = sphi 0, %s137
      %s141 = sphi 0, %s140
      %s157 = sphi 0, %s141
    $region4: #{tpu_custom_call.1} parent=1 // loop_header_branch
      %20 = sbr.rel (%p18) target = $region8
    $region5: #{tpu_custom_call.1} parent=1 // loop_body
      %s22 = ssub.s32 %s17, 1
      %s23 = ssub.s32 %s17, 2
      %s24 = sadd.s32 %s17, 1
      %s25 = ssub.s32 %s17, %s24
      %p26 = scmp.eq.s32.totalorder %s25, 0
      %s28 = sadd.s32 %s27, 1
      %s29 = scalar_select %p26, %s27, %s28
      %p32 = pneg %p26
      %p33 = scmp.eq.s32.totalorder %s17, 1
      %p34 = por %p32, %p33
      %p35 = scmp.ne.s32.totalorder %s27, %s30
      %p36 = scmp.eq.s32.totalorder %s17, 0
      %p37 = por %p35, %p36
      %p38 = scmp.ne.s32.totalorder %s27, %s30
      %p39 = scmp.eq.s32.totalorder %s22, 1
      %p40 = por %p38, %p39
      %p41 = scmp.ne.s32.totalorder %s30, %s31
      %p42 = scmp.eq.s32.totalorder %s22, 0
      %p43 = por %p41, %p42
      %p44 = scmp.ne.s32.totalorder %s30, %s31
      %p45 = scmp.eq.s32.totalorder %s23, 1
      %p46 = por %p44, %p45
      %p48 = scmp.ne.s32.totalorder %s31, %s47
      %p49 = scmp.eq.s32.totalorder %s23, 0
      %p50 = por %p48, %p49
      %s52 = sadd.s32 %s51, 1
      %p55 = scmp.eq.s32.totalorder %s17, 1
      %p56 = scmp.ne.s32.totalorder %s51, %s53
      %p57 = scmp.eq.s32.totalorder %s17, 0
      %p58 = por %p56, %p57
      %p59 = scmp.ne.s32.totalorder %s51, %s53
      %p60 = scmp.eq.s32.totalorder %s22, 1
      %p61 = por %p59, %p60
      %p62 = scmp.ne.s32.totalorder %s53, %s54
      %p63 = scmp.eq.s32.totalorder %s22, 0
      %p64 = por %p62, %p63
      %p65 = scmp.ne.s32.totalorder %s53, %s54
      %p66 = scmp.eq.s32.totalorder %s23, 1
      %p67 = por %p65, %p66
      %p69 = scmp.ne.s32.totalorder %s54, %s68
      %p70 = scmp.eq.s32.totalorder %s23, 0
      %p71 = por %p69, %p70
      %s73 = sadd.s32 %s72, 1
      %p76 = scmp.eq.s32.totalorder %s17, 1
      %p77 = scmp.ne.s32.totalorder %s72, %s74
      %p78 = scmp.eq.s32.totalorder %s17, 0
      %p79 = por %p77, %p78
      %p80 = scmp.ne.s32.totalorder %s72, %s74
      %p81 = scmp.eq.s32.totalorder %s22, 1
      %p82 = por %p80, %p81
      %p83 = scmp.ne.s32.totalorder %s74, %s75
      %p84 = scmp.eq.s32.totalorder %s22, 0
      %p85 = por %p83, %p84
      %p86 = scmp.ne.s32.totalorder %s74, %s75
      %p87 = scmp.eq.s32.totalorder %s23, 1
      %p88 = por %p86, %p87
      %p90 = scmp.ne.s32.totalorder %s75, %s89
      %p91 = scmp.eq.s32.totalorder %s23, 0
      %p92 = por %p90, %p91
      %s94 = sadd.s32 %s93, 1
      %p97 = scmp.eq.s32.totalorder %s17, 1
      %p98 = scmp.ne.s32.totalorder %s93, %s95
      %p99 = scmp.eq.s32.totalorder %s17, 0
      %p100 = por %p98, %p99
      %p101 = scmp.ne.s32.totalorder %s93, %s95
      %p102 = scmp.eq.s32.totalorder %s22, 1
      %p103 = por %p101, %p102
      %p104 = scmp.ne.s32.totalorder %s95, %s96
      %p105 = scmp.eq.s32.totalorder %s22, 0
      %p106 = por %p104, %p105
      %p107 = scmp.ne.s32.totalorder %s95, %s96
      %p108 = scmp.eq.s32.totalorder %s23, 1
      %p109 = por %p107, %p108
      %p111 = scmp.ne.s32.totalorder %s96, %s110
      %p112 = scmp.eq.s32.totalorder %s23, 0
      %p113 = por %p111, %p112
      %s115 = sadd.s32 %s114, 1
      %p118 = scmp.eq.s32.totalorder %s17, 1
      %p119 = scmp.ne.s32.totalorder %s114, %s116
      %p120 = scmp.eq.s32.totalorder %s17, 0
      %p121 = por %p119, %p120
      %p122 = scmp.ne.s32.totalorder %s114, %s116
      %p123 = scmp.eq.s32.totalorder %s22, 1
      %p124 = por %p122, %p123
      %p125 = scmp.ne.s32.totalorder %s116, %s117
      %p126 = scmp.eq.s32.totalorder %s22, 0
      %p127 = por %p125, %p126
      %p128 = scmp.ne.s32.totalorder %s116, %s117
      %p129 = scmp.eq.s32.totalorder %s23, 1
      %p130 = por %p128, %p129
      %p132 = scmp.ne.s32.totalorder %s117, %s131
      %p133 = scmp.eq.s32.totalorder %s23, 0
      %p134 = por %p132, %p133
      %s135 = ssub.s32 %s17, %s24
      %p136 = scmp.eq.s32.totalorder %s135, 0
      %s138 = sadd.s32 %s137, 1
      %s139 = scalar_select %p136, %s137, %s138
      %p142 = pneg %p136
      %p143 = scmp.eq.s32.totalorder %s17, 1
      %p144 = por %p142, %p143
      %p145 = scmp.ne.s32.totalorder %s137, %s140
      %p146 = scmp.eq.s32.totalorder %s17, 0
      %p147 = por %p145, %p146
      %p148 = scmp.ne.s32.totalorder %s137, %s140
      %p149 = scmp.eq.s32.totalorder %s22, 1
      %p150 = por %p148, %p149
      %p151 = scmp.ne.s32.totalorder %s140, %s141
      %p152 = scmp.eq.s32.totalorder %s22, 0
      %p153 = por %p151, %p152
      %p154 = scmp.ne.s32.totalorder %s140, %s141
      %p155 = scmp.eq.s32.totalorder %s23, 1
      %p156 = por %p154, %p155
      %p158 = scmp.ne.s32.totalorder %s141, %s157
      %p159 = scmp.eq.s32.totalorder %s23, 0
      %p160 = por %p158, %p159
      %p161 = scmp.le.s32.totalorder 1, %s17
      %p162 = scmp.lt.s32.totalorder %s17, 3
      %p163 = pnand %p161, %p162
      %p164 = pneg %p163
      // Predicated region
      $region9: #{tpu_custom_call.1} parent=5 // pred_check
        _
      $region10: #{tpu_custom_call.1} parent=5 // pred_check_branch
        %166 = sbr.rel (%p163) target = $region12
      $region11: #{tpu_custom_call.1} parent=5 // pred_region
        %s167 = ssub.s32 %s17, 1
        // Predicated region
        $region13: #{tpu_custom_call.1} parent=11 // pred_check
          %p168 = pneg %p64
        $region14: #{tpu_custom_call.1} parent=11 // pred_check_branch
          %170 = sbr.rel (%p168) target = $region16
        $region15: #{tpu_custom_call.1} parent=11 // pred_region
          _
        $region16: #{tpu_custom_call.1} parent=11 // pred_fallthru
          _
        // Predicated region
        $region17: #{tpu_custom_call.1} parent=11 // pred_check
          %p171 = pneg %p85
        $region18: #{tpu_custom_call.1} parent=11 // pred_check_branch
          %173 = sbr.rel (%p171) target = $region20
        $region19: #{tpu_custom_call.1} parent=11 // pred_region
          _
        $region20: #{tpu_custom_call.1} parent=11 // pred_fallthru
          _
        // Predicated region
        $region21: #{tpu_custom_call.1} parent=11 // pred_check
          %p174 = pneg %p106
        $region22: #{tpu_custom_call.1} parent=11 // pred_check_branch
          %176 = sbr.rel (%p174) target = $region24
        $region23: #{tpu_custom_call.1} parent=11 // pred_region
          _
        $region24: #{tpu_custom_call.1} parent=11 // pred_fallthru
          _
        // Predicated region
        $region25: #{tpu_custom_call.1} parent=11 // pred_check
          %p177 = pneg %p127
        $region26: #{tpu_custom_call.1} parent=11 // pred_check_branch
          %179 = sbr.rel (%p177) target = $region28
        $region27: #{tpu_custom_call.1} parent=11 // pred_region
          _
        $region28: #{tpu_custom_call.1} parent=11 // pred_fallthru
          _
      $region12: #{tpu_custom_call.1} parent=5 // pred_fallthru
        _
      %p180 = scmp.lt.s32.totalorder %s17, 2
      // Predicated region
      $region29: #{tpu_custom_call.1} parent=5 // pred_check
        %p181 = pneg %p180
      $region30: #{tpu_custom_call.1} parent=5 // pred_check_branch
        %183 = sbr.rel (%p181) target = $region32
      $region31: #{tpu_custom_call.1} parent=5 // pred_region
        // Predicated region
        $region33: #{tpu_custom_call.1} parent=31 // pred_check
          %p184 = pneg %p37
        $region34: #{tpu_custom_call.1} parent=31 // pred_check_branch
          %186 = sbr.rel (%p184) target = $region36
        $region35: #{tpu_custom_call.1} parent=31 // pred_region
          %s187 = sand.u32 %s27, 1
          %s188 = scalar_lea.sflag [#allocation3], %s187
          %s189 = sand.u32 %s27, 1
          %s190 = smul.addr %s189, 320
          %s191 = scalar_lea.vmem [#allocation2], %s190
          %s192 = smul.u32 16, %s17
          %s194 = ssub.s32 5120, 5120
          %195 = vsyncadd %s188, %s194
          %s196 = smul.addr %s192, 64
          %s197 = scalar_lea.hbm %s0, %s196
          %s198 = sshll.u32 %s191, 4
          %s199 = int_to_ptr.vmem [resolvable:$true] %s198
          %204 = dma.hbm_to_vmem [thread:$0]  %s197, 5120, %s199, %s188, 2048, 1024, 64
        $region36: #{tpu_custom_call.1} parent=31 // pred_fallthru
          _
      $region32: #{tpu_custom_call.1} parent=5 // pred_fallthru
        _
      %p205 = scmp.le.s32.totalorder 1, %s17
      %p206 = scmp.lt.s32.totalorder %s17, 3
      %p207 = pnand %p205, %p206
      %p208 = pneg %p207
      // Predicated region
      $region37: #{tpu_custom_call.1} parent=5 // pred_check
        _
      $region38: #{tpu_custom_call.1} parent=5 // pred_check_branch
        %210 = sbr.rel (%p207) target = $region40
      $region39: #{tpu_custom_call.1} parent=5 // pred_region
        %s211 = ssub.s32 %s17, 1
        %s212 = sand.u32 %s30, 1
        %s213 = scalar_lea.sflag [#allocation3], %s212
        %s214 = sand.u32 %s30, 1
        %s215 = smul.addr %s214, 320
        %s216 = scalar_lea.vmem [#allocation2], %s215
        // Predicated region
        $region41: #{tpu_custom_call.1} parent=39 // pred_check
          %p217 = pneg %p43
        $region42: #{tpu_custom_call.1} parent=39 // pred_check_branch
          %219 = sbr.rel (%p217) target = $region44
        $region43: #{tpu_custom_call.1} parent=39 // pred_region
          %220 = dma.done %s213, 5120
        $region44: #{tpu_custom_call.1} parent=39 // pred_fallthru
          _
        %s221 = sand.u32 %s30, 1
        %s222 = scalar_lea.sflag [#allocation3], %s221
        %s223 = sand.u32 %s30, 1
        %s224 = smul.addr %s223, 320
        %s225 = scalar_lea.vmem [#allocation2], %s224
        %p226 = pneg %p43
        %p227 = pneg %p40
        %p228 = pneg %p64
        %p229 = pneg %p61
        %p230 = pneg %p85
        %p231 = pneg %p82
        %p232 = pneg %p106
        %p233 = pneg %p103
        %p234 = pneg %p127
        %p235 = pneg %p124
        %p236 = pneg %p153
        %p237 = pneg %p150
        %s238 = sand.u32 %s140, 1
        %s239 = scalar_lea.sflag [#allocation4], %s238
        %s240 = sand.u32 %s140, 1
        %s241 = smul.addr %s240, 32
        %s242 = scalar_lea.vmem [#allocation5], %s241
        %s243 = smul.u32 16, %s22
        %s244 = smul.u32 16, %s22
        %v246 = vld [vmem:[%s1] sm:$0xff]
        %v247 = vld [vmem:[%s1 + $0x8] sm:$0xff]
        %v248 = vld [vmem:[%s216] sm:$0xff]
        %v249 = vld [vmem:[%s216 + $0x8] sm:$0xff]
        %v250 = vld [vmem:[%s216 + $0x10] sm:$0xff]
        %v251 = vld [vmem:[%s216 + $0x18] sm:$0xff]
        %v252 = vld [vmem:[%s216 + $0x20] sm:$0xff]
        %v253 = vld [vmem:[%s216 + $0x28] sm:$0xff]
        %v254 = vld [vmem:[%s216 + $0x30] sm:$0xff]
        %v255 = vld [vmem:[%s216 + $0x38] sm:$0xff]
        %v256 = vld [vmem:[%s216 + $0x40] sm:$0xff]
        %v257 = vld [vmem:[%s216 + $0x48] sm:$0xff]
        %v258 = vld [vmem:[%s216 + $0x50] sm:$0xff]
        %v259 = vld [vmem:[%s216 + $0x58] sm:$0xff]
        %v260 = vld [vmem:[%s216 + $0x60] sm:$0xff]
        %v261 = vld [vmem:[%s216 + $0x68] sm:$0xff]
        %v262 = vld [vmem:[%s216 + $0x70] sm:$0xff]
        %v263 = vld [vmem:[%s216 + $0x78] sm:$0xff]
        %v264 = vld [vmem:[%s216 + $0x80] sm:$0xff]
        %v265 = vld [vmem:[%s216 + $0x88] sm:$0xff]
        %v266 = vld [vmem:[%s216 + $0x90] sm:$0xff]
        %v267 = vld [vmem:[%s216 + $0x98] sm:$0xff]
        %v268 = vld [vmem:[%s216 + $0xa0] sm:$0xff]
        %v269 = vld [vmem:[%s216 + $0xa8] sm:$0xff]
        %v270 = vld [vmem:[%s216 + $0xb0] sm:$0xff]
        %v271 = vld [vmem:[%s216 + $0xb8] sm:$0xff]
        %v272 = vld [vmem:[%s216 + $0xc0] sm:$0xff]
        %v273 = vld [vmem:[%s216 + $0xc8] sm:$0xff]
        %v274 = vld [vmem:[%s216 + $0xd0] sm:$0xff]
        %v275 = vld [vmem:[%s216 + $0xd8] sm:$0xff]
        %v276 = vld [vmem:[%s216 + $0xe0] sm:$0xff]
        %v277 = vld [vmem:[%s216 + $0xe8] sm:$0xff]
        %v278 = vld [vmem:[%s216 + $0xf0] sm:$0xff]
        %v279 = vld [vmem:[%s216 + $0xf8] sm:$0xff]
        %v280 = vld [vmem:[%s216 + $0x100] sm:$0x33]
        %v281 = vld [vmem:[%s216 + $0x108] sm:$0x33]
        %v282 = vld [vmem:[%s216 + $0x110] sm:$0x33]
        %v283 = vld [vmem:[%s216 + $0x118] sm:$0x33]
        %v284 = vld [vmem:[%s216 + $0x120] sm:$0x33]
        %v285 = vld [vmem:[%s216 + $0x128] sm:$0x33]
        %v286 = vld [vmem:[%s216 + $0x130] sm:$0x33]
        %v287 = vld [vmem:[%s216 + $0x138] sm:$0x33]
        %v288 = vld [vmem:[%s2] sm:$0xff]
        %v289 = vld [vmem:[%s2 + $0x8] sm:$0xff]
        %291 = vset.pattern.permute.xlu0 0
        %292 = vperm.xlu0 %291, %v288
        %v293 = vpop.permute.xlu0 %292
        %296 = vset.pattern.permute.xlu0 0
        %297 = vperm.xlu0 %296, %v289
        %v298 = vpop.permute.xlu0 %297
        %v340 = vunpack.c.l.b16 %v248
        %v341 = vunpack.c.h.b16 %v248
        %v342 = vunpack.c.l.b16 %v249
        %v343 = vunpack.c.h.b16 %v249
        %v344 = vunpack.c.l.b16 %v250
        %v345 = vunpack.c.h.b16 %v250
        %v346 = vunpack.c.l.b16 %v251
        %v347 = vunpack.c.h.b16 %v251
        %v348 = vunpack.c.l.b16 %v252
        %v349 = vunpack.c.h.b16 %v252
        %v350 = vunpack.c.l.b16 %v253
        %v351 = vunpack.c.h.b16 %v253
        %v352 = vunpack.c.l.b16 %v254
        %v353 = vunpack.c.h.b16 %v254
        %v354 = vunpack.c.l.b16 %v255
        %v355 = vunpack.c.h.b16 %v255
        %v356 = vunpack.c.l.b16 %v256
        %v357 = vunpack.c.h.b16 %v256
        %v358 = vunpack.c.l.b16 %v257
        %v359 = vunpack.c.h.b16 %v257
        %v360 = vunpack.c.l.b16 %v258
        %v361 = vunpack.c.h.b16 %v258
        %v362 = vunpack.c.l.b16 %v259
        %v363 = vunpack.c.h.b16 %v259
        %v364 = vunpack.c.l.b16 %v260
        %v365 = vunpack.c.h.b16 %v260
        %v366 = vunpack.c.l.b16 %v261
        %v367 = vunpack.c.h.b16 %v261
        %v368 = vunpack.c.l.b16 %v262
        %v369 = vunpack.c.h.b16 %v262
        %v370 = vunpack.c.l.b16 %v263
        %v371 = vunpack.c.h.b16 %v263
        %v372 = vunpack.c.l.b16 %v264
        %v373 = vunpack.c.h.b16 %v264
        %v374 = vunpack.c.l.b16 %v265
        %v375 = vunpack.c.h.b16 %v265
        %v376 = vunpack.c.l.b16 %v266
        %v377 = vunpack.c.h.b16 %v266
        %v378 = vunpack.c.l.b16 %v267
        %v379 = vunpack.c.h.b16 %v267
        %v380 = vunpack.c.l.b16 %v268
        %v381 = vunpack.c.h.b16 %v268
        %v382 = vunpack.c.l.b16 %v269
        %v383 = vunpack.c.h.b16 %v269
        %v384 = vunpack.c.l.b16 %v270
        %v385 = vunpack.c.h.b16 %v270
        %v386 = vunpack.c.l.b16 %v271
        %v387 = vunpack.c.h.b16 %v271
        %v388 = vunpack.c.l.b16 %v272
        %v389 = vunpack.c.h.b16 %v272
        %v390 = vunpack.c.l.b16 %v273
        %v391 = vunpack.c.h.b16 %v273
        %v392 = vunpack.c.l.b16 %v274
        %v393 = vunpack.c.h.b16 %v274
        %v394 = vunpack.c.l.b16 %v275
        %v395 = vunpack.c.h.b16 %v275
        %v396 = vunpack.c.l.b16 %v276
        %v397 = vunpack.c.h.b16 %v276
        %v398 = vunpack.c.l.b16 %v277
        %v399 = vunpack.c.h.b16 %v277
        %v400 = vunpack.c.l.b16 %v278
        %v401 = vunpack.c.h.b16 %v278
        %v402 = vunpack.c.l.b16 %v279
        %v403 = vunpack.c.h.b16 %v279
        %v404 = vunpack.c.l.b16 %v280
        %v405 = vunpack.c.h.b16 %v280
        %v406 = vunpack.c.l.b16 %v281
        %v407 = vunpack.c.h.b16 %v281
        %v408 = vunpack.c.l.b16 %v282
        %v409 = vunpack.c.h.b16 %v282
        %v410 = vunpack.c.l.b16 %v283
        %v411 = vunpack.c.h.b16 %v283
        %v412 = vunpack.c.l.b16 %v284
        %v413 = vunpack.c.h.b16 %v284
        %v414 = vunpack.c.l.b16 %v285
        %v415 = vunpack.c.h.b16 %v285
        %v416 = vunpack.c.l.b16 %v286
        %v417 = vunpack.c.h.b16 %v286
        %v418 = vunpack.c.l.b16 %v287
        %v419 = vunpack.c.h.b16 %v287
        %v420 = vpack.c.b16 %v356, %v340
        %v421 = vpack.c.b16 %v357, %v341
        %v422 = vpack.c.b16 %v358, %v342
        %v423 = vpack.c.b16 %v359, %v343
        %v424 = vpack.c.b16 %v360, %v344
        %v425 = vpack.c.b16 %v361, %v345
        %v426 = vpack.c.b16 %v362, %v346
        %v427 = vpack.c.b16 %v363, %v347
        %v428 = vpack.c.b16 %v364, %v348
        %v429 = vpack.c.b16 %v365, %v349
        %v430 = vpack.c.b16 %v366, %v350
        %v431 = vpack.c.b16 %v367, %v351
        %v432 = vpack.c.b16 %v368, %v352
        %v433 = vpack.c.b16 %v369, %v353
        %v434 = vpack.c.b16 %v370, %v354
        %v435 = vpack.c.b16 %v371, %v355
        %v436 = vpack.c.b16 %v388, %v372
        %v437 = vpack.c.b16 %v389, %v373
        %v438 = vpack.c.b16 %v390, %v374
        %v439 = vpack.c.b16 %v391, %v375
        %v440 = vpack.c.b16 %v392, %v376
        %v441 = vpack.c.b16 %v393, %v377
        %v442 = vpack.c.b16 %v394, %v378
        %v443 = vpack.c.b16 %v395, %v379
        %v444 = vpack.c.b16 %v396, %v380
        %v445 = vpack.c.b16 %v397, %v381
        %v446 = vpack.c.b16 %v398, %v382
        %v447 = vpack.c.b16 %v399, %v383
        %v448 = vpack.c.b16 %v400, %v384
        %v449 = vpack.c.b16 %v401, %v385
        %v450 = vpack.c.b16 %v402, %v386
        %v451 = vpack.c.b16 %v403, %v387
        %v452 = vpack.c.b16 %v404, %v404
        %v453 = vpack.c.b16 %v405, %v405
        %v454 = vpack.c.b16 %v406, %v406
        %v455 = vpack.c.b16 %v407, %v407
        %v456 = vpack.c.b16 %v408, %v408
        %v457 = vpack.c.b16 %v409, %v409
        %v458 = vpack.c.b16 %v410, %v410
        %v459 = vpack.c.b16 %v411, %v411
        %v460 = vpack.c.b16 %v412, %v412
        %v461 = vpack.c.b16 %v413, %v413
        %v462 = vpack.c.b16 %v414, %v414
        %v463 = vpack.c.b16 %v415, %v415
        %v464 = vpack.c.b16 %v416, %v416
        %v465 = vpack.c.b16 %v417, %v417
        %v466 = vpack.c.b16 %v418, %v418
        %v467 = vpack.c.b16 %v419, %v419
        %vm500 = vcmask 293888
        %v502 = vsel %vm500, %v246, 0
        %v505 = vsel %vm500, %v247, 0
        %vm507 = vcmask 1041408
        %v509 = vsel %vm507, %v452, 0
        %v512 = vsel %vm507, %v453, 0
        %v515 = vsel %vm507, %v454, 0
        %v518 = vsel %vm507, %v455, 0
        %v521 = vsel %vm507, %v456, 0
        %v524 = vsel %vm507, %v457, 0
        %v527 = vsel %vm507, %v458, 0
        %v530 = vsel %vm507, %v459, 0
        %v533 = vsel %vm507, %v460, 0
        %v536 = vsel %vm507, %v461, 0
        %v539 = vsel %vm507, %v462, 0
        %v542 = vsel %vm507, %v463, 0
        %v545 = vsel %vm507, %v464, 0
        %v548 = vsel %vm507, %v465, 0
        %v551 = vsel %vm507, %v466, 0
        %v554 = vsel %vm507, %v467, 0
        %556 = vmatprep.subr.bf16.mxu0 %v421
        %557 = vmatpush1.bf16.msra.mxu0 %v420
        %558 = vmatprep.subr.bf16.mxu0 %v437
        %559 = vmatpush1.bf16.msra.mxu0 %v436
        %560 = vmatprep.subr.bf16.mxu0 %v512
        %561 = vmatpush1.bf16.msra.mxu0 %v509
        %562 = vmatprep.subr.bf16.mxu0 0
        %563 = vmatpush1.bf16.msra.mxu0 0
        %564 = vmatprep.subr.bf16.mxu0 0
        %565 = vmatpush1.bf16.msra.mxu0 0
        %566 = vmatprep.subr.bf16.mxu0 0
        %567 = vmatpush1.bf16.msra.mxu0 0
        %568 = vmatprep.subr.bf16.mxu0 0
        %569 = vmatpush1.bf16.msra.mxu0 0
        %570 = vmatprep.subr.bf16.mxu0 0
        %571 = vmatpush1.bf16.msra.mxu0 0
        %572 = vmatprep.subr.bf16.mxu0 0
        %573 = vmatpush1.bf16.msra.mxu0 0
        %574 = vmatprep.subr.bf16.mxu0 0
        %575 = vmatpush1.bf16.msra.mxu0 0
        %576 = vmatprep.subr.bf16.mxu0 0
        %577 = vmatpush1.bf16.msra.mxu0 0
        %578 = vmatprep.subr.bf16.mxu0 0
        %579 = vmatpush1.bf16.msra.mxu0 0
        %580 = vmatprep.subr.bf16.mxu0 0
        %581 = vmatpush1.bf16.msra.mxu0 0
        %582 = vmatprep.subr.bf16.mxu0 0
        %583 = vmatpush1.bf16.msra.mxu0 0
        %584 = vmatprep.subr.bf16.mxu0 0
        %585 = vmatpush1.bf16.msra.mxu0 0
        %586 = vmatprep.subr.bf16.mxu0 0
        %587 = vmatpush1.bf16.msra.mxu0 0
        %588 = vmatprep.mubr.f32.mxu0 0.0
        %589 = vmatmul.mubr.f32.gmra.mrb[0].mxu0 %v502
        %v590 = vpop.f32.mrb[0].mxu0
        %v591 = vadd.f32 %v293, %v590
        %v592 = vpop.f32.mrb[0].mxu0
        %v593 = vadd.f32 %v293, %v592
        %594 = vmatprep.mubr.f32.mxu0 0.0
        %595 = vmatmul.mubr.f32.gmra.mrb[0].mxu0 %v505
        %v596 = vpop.f32.mrb[0].mxu0
        %v597 = vadd.f32 %v298, %v596
        %v598 = vpop.f32.mrb[0].mxu0
        %v599 = vadd.f32 %v298, %v598
        %600 = vdwg.mxu0
        %601 = vmatprep.subr.bf16.mxu0 %v423
        %602 = vmatpush1.bf16.msra.mxu0 %v422
        %603 = vmatprep.subr.bf16.mxu0 %v439
        %604 = vmatpush1.bf16.msra.mxu0 %v438
        %605 = vmatprep.subr.bf16.mxu0 %v518
        %606 = vmatpush1.bf16.msra.mxu0 %v515
        %607 = vmatprep.subr.bf16.mxu0 0
        %608 = vmatpush1.bf16.msra.mxu0 0
        %609 = vmatprep.subr.bf16.mxu0 0
        %610 = vmatpush1.bf16.msra.mxu0 0
        %611 = vmatprep.subr.bf16.mxu0 0
        %612 = vmatpush1.bf16.msra.mxu0 0
        %613 = vmatprep.subr.bf16.mxu0 0
        %614 = vmatpush1.bf16.msra.mxu0 0
        %615 = vmatprep.subr.bf16.mxu0 0
        %616 = vmatpush1.bf16.msra.mxu0 0
        %617 = vmatprep.subr.bf16.mxu0 0
        %618 = vmatpush1.bf16.msra.mxu0 0
        %619 = vmatprep.subr.bf16.mxu0 0
        %620 = vmatpush1.bf16.msra.mxu0 0
        %621 = vmatprep.subr.bf16.mxu0 0
        %622 = vmatpush1.bf16.msra.mxu0 0
        %623 = vmatprep.subr.bf16.mxu0 0
        %624 = vmatpush1.bf16.msra.mxu0 0
        %625 = vmatprep.subr.bf16.mxu0 0
        %626 = vmatpush1.bf16.msra.mxu0 0
        %627 = vmatprep.subr.bf16.mxu0 0
        %628 = vmatpush1.bf16.msra.mxu0 0
        %629 = vmatprep.subr.bf16.mxu0 0
        %630 = vmatpush1.bf16.msra.mxu0 0
        %631 = vmatprep.subr.bf16.mxu0 0
        %632 = vmatpush1.bf16.msra.mxu0 0
        %633 = vmatprep.mubr.f32.mxu0 0.0
        %634 = vmatmul.mubr.f32.gmra.mrb[0].mxu0 %v502
        %v635 = vpop.f32.mrb[0].mxu0
        %v636 = vadd.f32 %v293, %v635
        %v637 = vpop.f32.mrb[0].mxu0
        %v638 = vadd.f32 %v293, %v637
        %639 = vmatprep.mubr.f32.mxu0 0.0
        %640 = vmatmul.mubr.f32.gmra.mrb[0].mxu0 %v505
        %v641 = vpop.f32.mrb[0].mxu0
        %v642 = vadd.f32 %v298, %v641
        %v643 = vpop.f32.mrb[0].mxu0
        %v644 = vadd.f32 %v298, %v643
        %645 = vdwg.mxu0
        %646 = vmatprep.subr.bf16.mxu0 %v425
        %647 = vmatpush1.bf16.msra.mxu0 %v424
        %648 = vmatprep.subr.bf16.mxu0 %v441
        %649 = vmatpush1.bf16.msra.mxu0 %v440
        %650 = vmatprep.subr.bf16.mxu0 %v524
        %651 = vmatpush1.bf16.msra.mxu0 %v521
        %652 = vmatprep.subr.bf16.mxu0 0
        %653 = vmatpush1.bf16.msra.mxu0 0
        %654 = vmatprep.subr.bf16.mxu0 0
        %655 = vmatpush1.bf16.msra.mxu0 0
        %656 = vmatprep.subr.bf16.mxu0 0
        %657 = vmatpush1.bf16.msra.mxu0 0
        %658 = vmatprep.subr.bf16.mxu0 0
        %659 = vmatpush1.bf16.msra.mxu0 0
        %660 = vmatprep.subr.bf16.mxu0 0
        %661 = vmatpush1.bf16.msra.mxu0 0
        %662 = vmatprep.subr.bf16.mxu0 0
        %663 = vmatpush1.bf16.msra.mxu0 0
        %664 = vmatprep.subr.bf16.mxu0 0
        %665 = vmatpush1.bf16.msra.mxu0 0
        %666 = vmatprep.subr.bf16.mxu0 0
        %667 = vmatpush1.bf16.msra.mxu0 0
        %668 = vmatprep.subr.bf16.mxu0 0
        %669 = vmatpush1.bf16.msra.mxu0 0
        %670 = vmatprep.subr.bf16.mxu0 0
        %671 = vmatpush1.bf16.msra.mxu0 0
        %672 = vmatprep.subr.bf16.mxu0 0
        %673 = vmatpush1.bf16.msra.mxu0 0
        %674 = vmatprep.subr.bf16.mxu0 0
        %675 = vmatpush1.bf16.msra.mxu0 0
        %676 = vmatprep.subr.bf16.mxu0 0
        %677 = vmatpush1.bf16.msra.mxu0 0
        %678 = vmatprep.mubr.f32.mxu0 0.0
        %679 = vmatmul.mubr.f32.gmra.mrb[0].mxu0 %v502
        %v680 = vpop.f32.mrb[0].mxu0
        %v681 = vadd.f32 %v293, %v680
        %v682 = vpop.f32.mrb[0].mxu0
        %v683 = vadd.f32 %v293, %v682
        %684 = vmatprep.mubr.f32.mxu0 0.0
        %685 = vmatmul.mubr.f32.gmra.mrb[0].mxu0 %v505
        %v686 = vpop.f32.mrb[0].mxu0
        %v687 = vadd.f32 %v298, %v686
        %v688 = vpop.f32.mrb[0].mxu0
        %v689 = vadd.f32 %v298, %v688
        %690 = vdwg.mxu0
        %691 = vmatprep.subr.bf16.mxu0 %v427
        %692 = vmatpush1.bf16.msra.mxu0 %v426
        %693 = vmatprep.subr.bf16.mxu0 %v443
        %694 = vmatpush1.bf16.msra.mxu0 %v442
        %695 = vmatprep.subr.bf16.mxu0 %v530
        %696 = vmatpush1.bf16.msra.mxu0 %v527
        %697 = vmatprep.subr.bf16.mxu0 0
        %698 = vmatpush1.bf16.msra.mxu0 0
        %699 = vmatprep.subr.bf16.mxu0 0
        %700 = vmatpush1.bf16.msra.mxu0 0
        %701 = vmatprep.subr.bf16.mxu0 0
        %702 = vmatpush1.bf16.msra.mxu0 0
        %703 = vmatprep.subr.bf16.mxu0 0
        %704 = vmatpush1.bf16.msra.mxu0 0
        %705 = vmatprep.subr.bf16.mxu0 0
        %706 = vmatpush1.bf16.msra.mxu0 0
        %707 = vmatprep.subr.bf16.mxu0 0
        %708 = vmatpush1.bf16.msra.mxu0 0
        %709 = vmatprep.subr.bf16.mxu0 0
        %710 = vmatpush1.bf16.msra.mxu0 0
        %711 = vmatprep.subr.bf16.mxu0 0
        %712 = vmatpush1.bf16.msra.mxu0 0
        %713 = vmatprep.subr.bf16.mxu0 0
        %714 = vmatpush1.bf16.msra.mxu0 0
        %715 = vmatprep.subr.bf16.mxu0 0
        %716 = vmatpush1.bf16.msra.mxu0 0
        %717 = vmatprep.subr.bf16.mxu0 0
        %718 = vmatpush1.bf16.msra.mxu0 0
        %719 = vmatprep.subr.bf16.mxu0 0
        %720 = vmatpush1.bf16.msra.mxu0 0
        %721 = vmatprep.subr.bf16.mxu0 0
        %722 = vmatpush1.bf16.msra.mxu0 0
        %723 = vmatprep.mubr.f32.mxu0 0.0
        %724 = vmatmul.mubr.f32.gmra.mrb[0].mxu0 %v502
        %v725 = vpop.f32.mrb[0].mxu0
        %v726 = vadd.f32 %v293, %v725
        %v727 = vpop.f32.mrb[0].mxu0
        %v728 = vadd.f32 %v293, %v727
        %729 = vmatprep.mubr.f32.mxu0 0.0
        %730 = vmatmul.mubr.f32.gmra.mrb[0].mxu0 %v505
        %v731 = vpop.f32.mrb[0].mxu0
        %v732 = vadd.f32 %v298, %v731
        %v733 = vpop.f32.mrb[0].mxu0
        %v734 = vadd.f32 %v298, %v733
        %735 = vdwg.mxu0
        %736 = vmatprep.subr.bf16.mxu0 %v429
        %737 = vmatpush1.bf16.msra.mxu0 %v428
        %738 = vmatprep.subr.bf16.mxu0 %v445
        %739 = vmatpush1.bf16.msra.mxu0 %v444
        %740 = vmatprep.subr.bf16.mxu0 %v536
        %741 = vmatpush1.bf16.msra.mxu0 %v533
        %742 = vmatprep.subr.bf16.mxu0 0
        %743 = vmatpush1.bf16.msra.mxu0 0
        %744 = vmatprep.subr.bf16.mxu0 0
        %745 = vmatpush1.bf16.msra.mxu0 0
        %746 = vmatprep.subr.bf16.mxu0 0
        %747 = vmatpush1.bf16.msra.mxu0 0
        %748 = vmatprep.subr.bf16.mxu0 0
        %749 = vmatpush1.bf16.msra.mxu0 0
        %750 = vmatprep.subr.bf16.mxu0 0
        %751 = vmatpush1.bf16.msra.mxu0 0
        %752 = vmatprep.subr.bf16.mxu0 0
        %753 = vmatpush1.bf16.msra.mxu0 0
        %754 = vmatprep.subr.bf16.mxu0 0
        %755 = vmatpush1.bf16.msra.mxu0 0
        %756 = vmatprep.subr.bf16.mxu0 0
        %757 = vmatpush1.bf16.msra.mxu0 0
        %758 = vmatprep.subr.bf16.mxu0 0
        %759 = vmatpush1.bf16.msra.mxu0 0
        %760 = vmatprep.subr.bf16.mxu0 0
        %761 = vmatpush1.bf16.msra.mxu0 0
        %762 = vmatprep.subr.bf16.mxu0 0
        %763 = vmatpush1.bf16.msra.mxu0 0
        %764 = vmatprep.subr.bf16.mxu0 0
        %765 = vmatpush1.bf16.msra.mxu0 0
        %766 = vmatprep.subr.bf16.mxu0 0
        %767 = vmatpush1.bf16.msra.mxu0 0
        %768 = vmatprep.mubr.f32.mxu0 0.0
        %769 = vmatmul.mubr.f32.gmra.mrb[0].mxu0 %v502
        %v770 = vpop.f32.mrb[0].mxu0
        %v771 = vadd.f32 %v293, %v770
        %v772 = vpop.f32.mrb[0].mxu0
        %v773 = vadd.f32 %v293, %v772
        %774 = vmatprep.mubr.f32.mxu0 0.0
        %775 = vmatmul.mubr.f32.gmra.mrb[0].mxu0 %v505
        %v776 = vpop.f32.mrb[0].mxu0
        %v777 = vadd.f32 %v298, %v776
        %v778 = vpop.f32.mrb[0].mxu0
        %v779 = vadd.f32 %v298, %v778
        %780 = vdwg.mxu0
        %781 = vmatprep.subr.bf16.mxu0 %v431
        %782 = vmatpush1.bf16.msra.mxu0 %v430
        %783 = vmatprep.subr.bf16.mxu0 %v447
        %784 = vmatpush1.bf16.msra.mxu0 %v446
        %785 = vmatprep.subr.bf16.mxu0 %v542
        %786 = vmatpush1.bf16.msra.mxu0 %v539
        %787 = vmatprep.subr.bf16.mxu0 0
        %788 = vmatpush1.bf16.msra.mxu0 0
        %789 = vmatprep.subr.bf16.mxu0 0
        %790 = vmatpush1.bf16.msra.mxu0 0
        %791 = vmatprep.subr.bf16.mxu0 0
        %792 = vmatpush1.bf16.msra.mxu0 0
        %793 = vmatprep.subr.bf16.mxu0 0
        %794 = vmatpush1.bf16.msra.mxu0 0
        %795 = vmatprep.subr.bf16.mxu0 0
        %796 = vmatpush1.bf16.msra.mxu0 0
        %797 = vmatprep.subr.bf16.mxu0 0
        %798 = vmatpush1.bf16.msra.mxu0 0
        %799 = vmatprep.subr.bf16.mxu0 0
        %800 = vmatpush1.bf16.msra.mxu0 0
        %801 = vmatprep.subr.bf16.mxu0 0
        %802 = vmatpush1.bf16.msra.mxu0 0
        %803 = vmatprep.subr.bf16.mxu0 0
        %804 = vmatpush1.bf16.msra.mxu0 0
        %805 = vmatprep.subr.bf16.mxu0 0
        %806 = vmatpush1.bf16.msra.mxu0 0
        %807 = vmatprep.subr.bf16.mxu0 0
        %808 = vmatpush1.bf16.msra.mxu0 0
        %809 = vmatprep.subr.bf16.mxu0 0
        %810 = vmatpush1.bf16.msra.mxu0 0
        %811 = vmatprep.subr.bf16.mxu0 0
        %812 = vmatpush1.bf16.msra.mxu0 0
        %813 = vmatprep.mubr.f32.mxu0 0.0
        %814 = vmatmul.mubr.f32.gmra.mrb[0].mxu0 %v502
        %v815 = vpop.f32.mrb[0].mxu0
        %v816 = vadd.f32 %v293, %v815
        %v817 = vpop.f32.mrb[0].mxu0
        %v818 = vadd.f32 %v293, %v817
        %819 = vmatprep.mubr.f32.mxu0 0.0
        %820 = vmatmul.mubr.f32.gmra.mrb[0].mxu0 %v505
        %v821 = vpop.f32.mrb[0].mxu0
        %v822 = vadd.f32 %v298, %v821
        %v823 = vpop.f32.mrb[0].mxu0
        %v824 = vadd.f32 %v298, %v823
        %825 = vdwg.mxu0
        %826 = vmatprep.subr.bf16.mxu0 %v433
        %827 = vmatpush1.bf16.msra.mxu0 %v432
        %828 = vmatprep.subr.bf16.mxu0 %v449
        %829 = vmatpush1.bf16.msra.mxu0 %v448
        %830 = vmatprep.subr.bf16.mxu0 %v548
        %831 = vmatpush1.bf16.msra.mxu0 %v545
        %832 = vmatprep.subr.bf16.mxu0 0
        %833 = vmatpush1.bf16.msra.mxu0 0
        %834 = vmatprep.subr.bf16.mxu0 0
        %835 = vmatpush1.bf16.msra.mxu0 0
        %836 = vmatprep.subr.bf16.mxu0 0
        %837 = vmatpush1.bf16.msra.mxu0 0
        %838 = vmatprep.subr.bf16.mxu0 0
        %839 = vmatpush1.bf16.msra.mxu0 0
        %840 = vmatprep.subr.bf16.mxu0 0
        %841 = vmatpush1.bf16.msra.mxu0 0
        %842 = vmatprep.subr.bf16.mxu0 0
        %843 = vmatpush1.bf16.msra.mxu0 0
        %844 = vmatprep.subr.bf16.mxu0 0
        %845 = vmatpush1.bf16.msra.mxu0 0
        %846 = vmatprep.subr.bf16.mxu0 0
        %847 = vmatpush1.bf16.msra.mxu0 0
        %848 = vmatprep.subr.bf16.mxu0 0
        %849 = vmatpush1.bf16.msra.mxu0 0
        %850 = vmatprep.subr.bf16.mxu0 0
        %851 = vmatpush1.bf16.msra.mxu0 0
        %852 = vmatprep.subr.bf16.mxu0 0
        %853 = vmatpush1.bf16.msra.mxu0 0
        %854 = vmatprep.subr.bf16.mxu0 0
        %855 = vmatpush1.bf16.msra.mxu0 0
        %856 = vmatprep.subr.bf16.mxu0 0
        %857 = vmatpush1.bf16.msra.mxu0 0
        %858 = vmatprep.mubr.f32.mxu0 0.0
        %859 = vmatmul.mubr.f32.gmra.mrb[0].mxu0 %v502
        %v860 = vpop.f32.mrb[0].mxu0
        %v861 = vadd.f32 %v293, %v860
        %v862 = vpop.f32.mrb[0].mxu0
        %v863 = vadd.f32 %v293, %v862
        %864 = vmatprep.mubr.f32.mxu0 0.0
        %865 = vmatmul.mubr.f32.gmra.mrb[0].mxu0 %v505
        %v866 = vpop.f32.mrb[0].mxu0
        %v867 = vadd.f32 %v298, %v866
        %v868 = vpop.f32.mrb[0].mxu0
        %v869 = vadd.f32 %v298, %v868
        %870 = vdwg.mxu0
        %871 = vmatprep.subr.bf16.mxu0 %v435
        %872 = vmatpush1.bf16.msra.mxu0 %v434
        %873 = vmatprep.subr.bf16.mxu0 %v451
        %874 = vmatpush1.bf16.msra.mxu0 %v450
        %875 = vmatprep.subr.bf16.mxu0 %v554
        %876 = vmatpush1.bf16.msra.mxu0 %v551
        %877 = vmatprep.subr.bf16.mxu0 0
        %878 = vmatpush1.bf16.msra.mxu0 0
        %879 = vmatprep.subr.bf16.mxu0 0
        %880 = vmatpush1.bf16.msra.mxu0 0
        %881 = vmatprep.subr.bf16.mxu0 0
        %882 = vmatpush1.bf16.msra.mxu0 0
        %883 = vmatprep.subr.bf16.mxu0 0
        %884 = vmatpush1.bf16.msra.mxu0 0
        %885 = vmatprep.subr.bf16.mxu0 0
        %886 = vmatpush1.bf16.msra.mxu0 0
        %887 = vmatprep.subr.bf16.mxu0 0
        %888 = vmatpush1.bf16.msra.mxu0 0
        %889 = vmatprep.subr.bf16.mxu0 0
        %890 = vmatpush1.bf16.msra.mxu0 0
        %891 = vmatprep.subr.bf16.mxu0 0
        %892 = vmatpush1.bf16.msra.mxu0 0
        %893 = vmatprep.subr.bf16.mxu0 0
        %894 = vmatpush1.bf16.msra.mxu0 0
        %895 = vmatprep.subr.bf16.mxu0 0
        %896 = vmatpush1.bf16.msra.mxu0 0
        %897 = vmatprep.subr.bf16.mxu0 0
        %898 = vmatpush1.bf16.msra.mxu0 0
        %899 = vmatprep.subr.bf16.mxu0 0
        %900 = vmatpush1.bf16.msra.mxu0 0
        %901 = vmatprep.subr.bf16.mxu0 0
        %902 = vmatpush1.bf16.msra.mxu0 0
        %903 = vmatprep.mubr.f32.mxu0 0.0
        %904 = vmatmul.mubr.f32.gmra.mrb[0].mxu0 %v502
        %v905 = vpop.f32.mrb[0].mxu0
        %v906 = vadd.f32 %v293, %v905
        %v907 = vpop.f32.mrb[0].mxu0
        %v908 = vadd.f32 %v293, %v907
        %909 = vmatprep.mubr.f32.mxu0 0.0
        %910 = vmatmul.mubr.f32.gmra.mrb[0].mxu0 %v505
        %v911 = vpop.f32.mrb[0].mxu0
        %v912 = vadd.f32 %v298, %v911
        %v913 = vpop.f32.mrb[0].mxu0
        %v914 = vadd.f32 %v298, %v913
        %915 = vdwg.mxu0
        %v916 = vmax.f32 %v591, 0.0
        %v917 = vmax.f32 %v593, 0.0
        %v918 = vmax.f32 %v636, 0.0
        %v919 = vmax.f32 %v638, 0.0
        %v920 = vmax.f32 %v681, 0.0
        %v921 = vmax.f32 %v683, 0.0
        %v922 = vmax.f32 %v726, 0.0
        %v923 = vmax.f32 %v728, 0.0
        %v924 = vmax.f32 %v771, 0.0
        %v925 = vmax.f32 %v773, 0.0
        %v926 = vmax.f32 %v816, 0.0
        %v927 = vmax.f32 %v818, 0.0
        %v928 = vmax.f32 %v861, 0.0
        %v929 = vmax.f32 %v863, 0.0
        %v930 = vmax.f32 %v906, 0.0
        %v931 = vmax.f32 %v908, 0.0
        %v932 = vmax.f32 %v597, 0.0
        %v933 = vmax.f32 %v599, 0.0
        %v934 = vmax.f32 %v642, 0.0
        %v935 = vmax.f32 %v644, 0.0
        %v936 = vmax.f32 %v687, 0.0
        %v937 = vmax.f32 %v689, 0.0
        %v938 = vmax.f32 %v732, 0.0
        %v939 = vmax.f32 %v734, 0.0
        %v940 = vmax.f32 %v777, 0.0
        %v941 = vmax.f32 %v779, 0.0
        %v942 = vmax.f32 %v822, 0.0
        %v943 = vmax.f32 %v824, 0.0
        %v944 = vmax.f32 %v867, 0.0
        %v945 = vmax.f32 %v869, 0.0
        %v946 = vmax.f32 %v912, 0.0
        %v947 = vmax.f32 %v914, 0.0
        %v948 = vld [vmem:[%s3] sm:$0x7]
        %v949 = vld [vmem:[%s4] sm:$0x7]
        %951 = vset.pattern.permute.xlu0 0
        %952 = vperm.xlu0 %951, %v949
        %v953 = vpop.permute.xlu0 %952
        %vm955 = vcmask 130048
        %v957 = vsel %vm955, %v948, 0
        %959 = vmatprep.subr.mxu0 %v917
        %960 = vmatpush1.msra.mxu0 %v916
        %961 = vmatprep.subr.mxu0 %v933
        %962 = vmatpush1.msra.mxu0 %v932
        %963 = vmatprep.subr.mxu0 0.0
        %964 = vmatpush1.msra.mxu0 0.0
        %965 = vmatprep.subr.mxu0 0.0
        %966 = vmatpush1.msra.mxu0 0.0
        %967 = vmatprep.subr.mxu0 0.0
        %968 = vmatpush1.msra.mxu0 0.0
        %969 = vmatprep.subr.mxu0 0.0
        %970 = vmatpush1.msra.mxu0 0.0
        %971 = vmatprep.subr.mxu0 0.0
        %972 = vmatpush1.msra.mxu0 0.0
        %973 = vmatprep.subr.mxu0 0.0
        %974 = vmatpush1.msra.mxu0 0.0
        %975 = vmatprep.subr.mxu0 0.0
        %976 = vmatpush1.msra.mxu0 0.0
        %977 = vmatprep.subr.mxu0 0.0
        %978 = vmatpush1.msra.mxu0 0.0
        %979 = vmatprep.subr.mxu0 0.0
        %980 = vmatpush1.msra.mxu0 0.0
        %981 = vmatprep.subr.mxu0 0.0
        %982 = vmatpush1.msra.mxu0 0.0
        %983 = vmatprep.subr.mxu0 0.0
        %984 = vmatpush1.msra.mxu0 0.0
        %985 = vmatprep.subr.mxu0 0.0
        %986 = vmatpush1.msra.mxu0 0.0
        %987 = vmatprep.subr.mxu0 0.0
        %988 = vmatpush1.msra.mxu0 0.0
        %989 = vmatprep.subr.mxu0 0.0
        %990 = vmatpush1.msra.mxu0 0.0
        %991 = vmatprep.subr.mxu0 0.0
        %992 = vmatpush1.msra.mxu0 0.0
        %993 = vmatprep.subr.mxu0 0.0
        %994 = vmatpush1.msra.mxu0 0.0
        %995 = vmatprep.subr.mxu0 0.0
        %996 = vmatpush1.msra.mxu0 0.0
        %997 = vmatprep.subr.mxu0 0.0
        %998 = vmatpush1.msra.mxu0 0.0
        %999 = vmatprep.subr.mxu0 0.0
        %1000 = vmatpush1.msra.mxu0 0.0
        %1001 = vmatprep.subr.mxu0 0.0
        %1002 = vmatpush1.msra.mxu0 0.0
        %1003 = vmatprep.subr.mxu0 0.0
        %1004 = vmatpush1.msra.mxu0 0.0
        %1005 = vmatprep.subr.mxu0 0.0
        %1006 = vmatpush1.msra.mxu0 0.0
        %1007 = vmatprep.subr.mxu0 0.0
        %1008 = vmatpush1.msra.mxu0 0.0
        %1009 = vmatprep.subr.mxu0 0.0
        %1010 = vmatpush1.msra.mxu0 0.0
        %1011 = vmatprep.subr.mxu0 0.0
        %1012 = vmatpush1.msra.mxu0 0.0
        %1013 = vmatprep.subr.mxu0 0.0
        %1014 = vmatpush1.msra.mxu0 0.0
        %1015 = vmatprep.subr.mxu0 0.0
        %1016 = vmatpush1.msra.mxu0 0.0
        %1017 = vmatprep.subr.mxu0 0.0
        %1018 = vmatpush1.msra.mxu0 0.0
        %1019 = vmatprep.subr.mxu0 0.0
        %1020 = vmatpush1.msra.mxu0 0.0
        %1021 = vmatprep.subr.mxu0 0.0
        %1022 = vmatpush1.msra.mxu0 0.0
        %1023 = vmatprep.mubr.f32.mxu0 0.0
        %1024 = vmatmul.mubr.f32.gmra.mrb[0].mxu0 %v957
        %v1025 = vpop.f32.mrb[0].mxu0
        %v1026 = vadd.f32 %v953, %v1025
        %v1027 = vpop.f32.mrb[0].mxu0
        %v1028 = vadd.f32 %v953, %v1027
        %1029 = vdwg.mxu0
        %1030 = vmatprep.subr.mxu0 %v919
        %1031 = vmatpush1.msra.mxu0 %v918
        %1032 = vmatprep.subr.mxu0 %v935
        %1033 = vmatpush1.msra.mxu0 %v934
        %1034 = vmatprep.subr.mxu0 0.0
        %1035 = vmatpush1.msra.mxu0 0.0
        %1036 = vmatprep.subr.mxu0 0.0
        %1037 = vmatpush1.msra.mxu0 0.0
        %1038 = vmatprep.subr.mxu0 0.0
        %1039 = vmatpush1.msra.mxu0 0.0
        %1040 = vmatprep.subr.mxu0 0.0
        %1041 = vmatpush1.msra.mxu0 0.0
        %1042 = vmatprep.subr.mxu0 0.0
        %1043 = vmatpush1.msra.mxu0 0.0
        %1044 = vmatprep.subr.mxu0 0.0
        %1045 = vmatpush1.msra.mxu0 0.0
        %1046 = vmatprep.subr.mxu0 0.0
        %1047 = vmatpush1.msra.mxu0 0.0
        %1048 = vmatprep.subr.mxu0 0.0
        %1049 = vmatpush1.msra.mxu0 0.0
        %1050 = vmatprep.subr.mxu0 0.0
        %1051 = vmatpush1.msra.mxu0 0.0
        %1052 = vmatprep.subr.mxu0 0.0
        %1053 = vmatpush1.msra.mxu0 0.0
        %1054 = vmatprep.subr.mxu0 0.0
        %1055 = vmatpush1.msra.mxu0 0.0
        %1056 = vmatprep.subr.mxu0 0.0
        %1057 = vmatpush1.msra.mxu0 0.0
        %1058 = vmatprep.subr.mxu0 0.0
        %1059 = vmatpush1.msra.mxu0 0.0
        %1060 = vmatprep.subr.mxu0 0.0
        %1061 = vmatpush1.msra.mxu0 0.0
        %1062 = vmatprep.subr.mxu0 0.0
        %1063 = vmatpush1.msra.mxu0 0.0
        %1064 = vmatprep.subr.mxu0 0.0
        %1065 = vmatpush1.msra.mxu0 0.0
        %1066 = vmatprep.subr.mxu0 0.0
        %1067 = vmatpush1.msra.mxu0 0.0
        %1068 = vmatprep.subr.mxu0 0.0
        %1069 = vmatpush1.msra.mxu0 0.0
        %1070 = vmatprep.subr.mxu0 0.0
        %1071 = vmatpush1.msra.mxu0 0.0
        %1072 = vmatprep.subr.mxu0 0.0
        %1073 = vmatpush1.msra.mxu0 0.0
        %1074 = vmatprep.subr.mxu0 0.0
        %1075 = vmatpush1.msra.mxu0 0.0
        %1076 = vmatprep.subr.mxu0 0.0
        %1077 = vmatpush1.msra.mxu0 0.0
        %1078 = vmatprep.subr.mxu0 0.0
        %1079 = vmatpush1.msra.mxu0 0.0
        %1080 = vmatprep.subr.mxu0 0.0
        %1081 = vmatpush1.msra.mxu0 0.0
        %1082 = vmatprep.subr.mxu0 0.0
        %1083 = vmatpush1.msra.mxu0 0.0
        %1084 = vmatprep.subr.mxu0 0.0
        %1085 = vmatpush1.msra.mxu0 0.0
        %1086 = vmatprep.subr.mxu0 0.0
        %1087 = vmatpush1.msra.mxu0 0.0
        %1088 = vmatprep.subr.mxu0 0.0
        %1089 = vmatpush1.msra.mxu0 0.0
        %1090 = vmatprep.subr.mxu0 0.0
        %1091 = vmatpush1.msra.mxu0 0.0
        %1092 = vmatprep.subr.mxu0 0.0
        %1093 = vmatpush1.msra.mxu0 0.0
        %1094 = vmatprep.mubr.f32.mxu0 0.0
        %1095 = vmatmul.mubr.f32.gmra.mrb[0].mxu0 %v957
        %v1096 = vpop.f32.mrb[0].mxu0
        %v1097 = vadd.f32 %v953, %v1096
        %v1098 = vpop.f32.mrb[0].mxu0
        %v1099 = vadd.f32 %v953, %v1098
        %1100 = vdwg.mxu0
        %1101 = vmatprep.subr.mxu0 %v921
        %1102 = vmatpush1.msra.mxu0 %v920
        %1103 = vmatprep.subr.mxu0 %v937
        %1104 = vmatpush1.msra.mxu0 %v936
        %1105 = vmatprep.subr.mxu0 0.0
        %1106 = vmatpush1.msra.mxu0 0.0
        %1107 = vmatprep.subr.mxu0 0.0
        %1108 = vmatpush1.msra.mxu0 0.0
        %1109 = vmatprep.subr.mxu0 0.0
        %1110 = vmatpush1.msra.mxu0 0.0
        %1111 = vmatprep.subr.mxu0 0.0
        %1112 = vmatpush1.msra.mxu0 0.0
        %1113 = vmatprep.subr.mxu0 0.0
        %1114 = vmatpush1.msra.mxu0 0.0
        %1115 = vmatprep.subr.mxu0 0.0
        %1116 = vmatpush1.msra.mxu0 0.0
        %1117 = vmatprep.subr.mxu0 0.0
        %1118 = vmatpush1.msra.mxu0 0.0
        %1119 = vmatprep.subr.mxu0 0.0
        %1120 = vmatpush1.msra.mxu0 0.0
        %1121 = vmatprep.subr.mxu0 0.0
        %1122 = vmatpush1.msra.mxu0 0.0
        %1123 = vmatprep.subr.mxu0 0.0
        %1124 = vmatpush1.msra.mxu0 0.0
        %1125 = vmatprep.subr.mxu0 0.0
        %1126 = vmatpush1.msra.mxu0 0.0
        %1127 = vmatprep.subr.mxu0 0.0
        %1128 = vmatpush1.msra.mxu0 0.0
        %1129 = vmatprep.subr.mxu0 0.0
        %1130 = vmatpush1.msra.mxu0 0.0
        %1131 = vmatprep.subr.mxu0 0.0
        %1132 = vmatpush1.msra.mxu0 0.0
        %1133 = vmatprep.subr.mxu0 0.0
        %1134 = vmatpush1.msra.mxu0 0.0
        %1135 = vmatprep.subr.mxu0 0.0
        %1136 = vmatpush1.msra.mxu0 0.0
        %1137 = vmatprep.subr.mxu0 0.0
        %1138 = vmatpush1.msra.mxu0 0.0
        %1139 = vmatprep.subr.mxu0 0.0
        %1140 = vmatpush1.msra.mxu0 0.0
        %1141 = vmatprep.subr.mxu0 0.0
        %1142 = vmatpush1.msra.mxu0 0.0
        %1143 = vmatprep.subr.mxu0 0.0
        %1144 = vmatpush1.msra.mxu0 0.0
        %1145 = vmatprep.subr.mxu0 0.0
        %1146 = vmatpush1.msra.mxu0 0.0
        %1147 = vmatprep.subr.mxu0 0.0
        %1148 = vmatpush1.msra.mxu0 0.0
        %1149 = vmatprep.subr.mxu0 0.0
        %1150 = vmatpush1.msra.mxu0 0.0
        %1151 = vmatprep.subr.mxu0 0.0
        %1152 = vmatpush1.msra.mxu0 0.0
        %1153 = vmatprep.subr.mxu0 0.0
        %1154 = vmatpush1.msra.mxu0 0.0
        %1155 = vmatprep.subr.mxu0 0.0
        %1156 = vmatpush1.msra.mxu0 0.0
        %1157 = vmatprep.subr.mxu0 0.0
        %1158 = vmatpush1.msra.mxu0 0.0
        %1159 = vmatprep.subr.mxu0 0.0
        %1160 = vmatpush1.msra.mxu0 0.0
        %1161 = vmatprep.subr.mxu0 0.0
        %1162 = vmatpush1.msra.mxu0 0.0
        %1163 = vmatprep.subr.mxu0 0.0
        %1164 = vmatpush1.msra.mxu0 0.0
        %1165 = vmatprep.mubr.f32.mxu0 0.0
        %1166 = vmatmul.mubr.f32.gmra.mrb[0].mxu0 %v957
        %v1167 = vpop.f32.mrb[0].mxu0
        %v1168 = vadd.f32 %v953, %v1167
        %v1169 = vpop.f32.mrb[0].mxu0
        %v1170 = vadd.f32 %v953, %v1169
        %1171 = vdwg.mxu0
        %1172 = vmatprep.subr.mxu0 %v923
        %1173 = vmatpush1.msra.mxu0 %v922
        %1174 = vmatprep.subr.mxu0 %v939
        %1175 = vmatpush1.msra.mxu0 %v938
        %1176 = vmatprep.subr.mxu0 0.0
        %1177 = vmatpush1.msra.mxu0 0.0
        %1178 = vmatprep.subr.mxu0 0.0
        %1179 = vmatpush1.msra.mxu0 0.0
        %1180 = vmatprep.subr.mxu0 0.0
        %1181 = vmatpush1.msra.mxu0 0.0
        %1182 = vmatprep.subr.mxu0 0.0
        %1183 = vmatpush1.msra.mxu0 0.0
        %1184 = vmatprep.subr.mxu0 0.0
        %1185 = vmatpush1.msra.mxu0 0.0
        %1186 = vmatprep.subr.mxu0 0.0
        %1187 = vmatpush1.msra.mxu0 0.0
        %1188 = vmatprep.subr.mxu0 0.0
        %1189 = vmatpush1.msra.mxu0 0.0
        %1190 = vmatprep.subr.mxu0 0.0
        %1191 = vmatpush1.msra.mxu0 0.0
        %1192 = vmatprep.subr.mxu0 0.0
        %1193 = vmatpush1.msra.mxu0 0.0
        %1194 = vmatprep.subr.mxu0 0.0
        %1195 = vmatpush1.msra.mxu0 0.0
        %1196 = vmatprep.subr.mxu0 0.0
        %1197 = vmatpush1.msra.mxu0 0.0
        %1198 = vmatprep.subr.mxu0 0.0
        %1199 = vmatpush1.msra.mxu0 0.0
        %1200 = vmatprep.subr.mxu0 0.0
        %1201 = vmatpush1.msra.mxu0 0.0
        %1202 = vmatprep.subr.mxu0 0.0
        %1203 = vmatpush1.msra.mxu0 0.0
        %1204 = vmatprep.subr.mxu0 0.0
        %1205 = vmatpush1.msra.mxu0 0.0
        %1206 = vmatprep.subr.mxu0 0.0
        %1207 = vmatpush1.msra.mxu0 0.0
        %1208 = vmatprep.subr.mxu0 0.0
        %1209 = vmatpush1.msra.mxu0 0.0
        %1210 = vmatprep.subr.mxu0 0.0
        %1211 = vmatpush1.msra.mxu0 0.0
        %1212 = vmatprep.subr.mxu0 0.0
        %1213 = vmatpush1.msra.mxu0 0.0
        %1214 = vmatprep.subr.mxu0 0.0
        %1215 = vmatpush1.msra.mxu0 0.0
        %1216 = vmatprep.subr.mxu0 0.0
        %1217 = vmatpush1.msra.mxu0 0.0
        %1218 = vmatprep.subr.mxu0 0.0
        %1219 = vmatpush1.msra.mxu0 0.0
        %1220 = vmatprep.subr.mxu0 0.0
        %1221 = vmatpush1.msra.mxu0 0.0
        %1222 = vmatprep.subr.mxu0 0.0
        %1223 = vmatpush1.msra.mxu0 0.0
        %1224 = vmatprep.subr.mxu0 0.0
        %1225 = vmatpush1.msra.mxu0 0.0
        %1226 = vmatprep.subr.mxu0 0.0
        %1227 = vmatpush1.msra.mxu0 0.0
        %1228 = vmatprep.subr.mxu0 0.0
        %1229 = vmatpush1.msra.mxu0 0.0
        %1230 = vmatprep.subr.mxu0 0.0
        %1231 = vmatpush1.msra.mxu0 0.0
        %1232 = vmatprep.subr.mxu0 0.0
        %1233 = vmatpush1.msra.mxu0 0.0
        %1234 = vmatprep.subr.mxu0 0.0
        %1235 = vmatpush1.msra.mxu0 0.0
        %1236 = vmatprep.mubr.f32.mxu0 0.0
        %1237 = vmatmul.mubr.f32.gmra.mrb[0].mxu0 %v957
        %v1238 = vpop.f32.mrb[0].mxu0
        %v1239 = vadd.f32 %v953, %v1238
        %v1240 = vpop.f32.mrb[0].mxu0
        %v1241 = vadd.f32 %v953, %v1240
        %1242 = vdwg.mxu0
        %1243 = vmatprep.subr.mxu0 %v925
        %1244 = vmatpush1.msra.mxu0 %v924
        %1245 = vmatprep.subr.mxu0 %v941
        %1246 = vmatpush1.msra.mxu0 %v940
        %1247 = vmatprep.subr.mxu0 0.0
        %1248 = vmatpush1.msra.mxu0 0.0
        %1249 = vmatprep.subr.mxu0 0.0
        %1250 = vmatpush1.msra.mxu0 0.0
        %1251 = vmatprep.subr.mxu0 0.0
        %1252 = vmatpush1.msra.mxu0 0.0
        %1253 = vmatprep.subr.mxu0 0.0
        %1254 = vmatpush1.msra.mxu0 0.0
        %1255 = vmatprep.subr.mxu0 0.0
        %1256 = vmatpush1.msra.mxu0 0.0
        %1257 = vmatprep.subr.mxu0 0.0
        %1258 = vmatpush1.msra.mxu0 0.0
        %1259 = vmatprep.subr.mxu0 0.0
        %1260 = vmatpush1.msra.mxu0 0.0
        %1261 = vmatprep.subr.mxu0 0.0
        %1262 = vmatpush1.msra.mxu0 0.0
        %1263 = vmatprep.subr.mxu0 0.0
        %1264 = vmatpush1.msra.mxu0 0.0
        %1265 = vmatprep.subr.mxu0 0.0
        %1266 = vmatpush1.msra.mxu0 0.0
        %1267 = vmatprep.subr.mxu0 0.0
        %1268 = vmatpush1.msra.mxu0 0.0
        %1269 = vmatprep.subr.mxu0 0.0
        %1270 = vmatpush1.msra.mxu0 0.0
        %1271 = vmatprep.subr.mxu0 0.0
        %1272 = vmatpush1.msra.mxu0 0.0
        %1273 = vmatprep.subr.mxu0 0.0
        %1274 = vmatpush1.msra.mxu0 0.0
        %1275 = vmatprep.subr.mxu0 0.0
        %1276 = vmatpush1.msra.mxu0 0.0
        %1277 = vmatprep.subr.mxu0 0.0
        %1278 = vmatpush1.msra.mxu0 0.0
        %1279 = vmatprep.subr.mxu0 0.0
        %1280 = vmatpush1.msra.mxu0 0.0
        %1281 = vmatprep.subr.mxu0 0.0
        %1282 = vmatpush1.msra.mxu0 0.0
        %1283 = vmatprep.subr.mxu0 0.0
        %1284 = vmatpush1.msra.mxu0 0.0
        %1285 = vmatprep.subr.mxu0 0.0
        %1286 = vmatpush1.msra.mxu0 0.0
        %1287 = vmatprep.subr.mxu0 0.0
        %1288 = vmatpush1.msra.mxu0 0.0
        %1289 = vmatprep.subr.mxu0 0.0
        %1290 = vmatpush1.msra.mxu0 0.0
        %1291 = vmatprep.subr.mxu0 0.0
        %1292 = vmatpush1.msra.mxu0 0.0
        %1293 = vmatprep.subr.mxu0 0.0
        %1294 = vmatpush1.msra.mxu0 0.0
        %1295 = vmatprep.subr.mxu0 0.0
        %1296 = vmatpush1.msra.mxu0 0.0
        %1297 = vmatprep.subr.mxu0 0.0
        %1298 = vmatpush1.msra.mxu0 0.0
        %1299 = vmatprep.subr.mxu0 0.0
        %1300 = vmatpush1.msra.mxu0 0.0
        %1301 = vmatprep.subr.mxu0 0.0
        %1302 = vmatpush1.msra.mxu0 0.0
        %1303 = vmatprep.subr.mxu0 0.0
        %1304 = vmatpush1.msra.mxu0 0.0
        %1305 = vmatprep.subr.mxu0 0.0
        %1306 = vmatpush1.msra.mxu0 0.0
        %1307 = vmatprep.mubr.f32.mxu0 0.0
        %1308 = vmatmul.mubr.f32.gmra.mrb[0].mxu0 %v957
        %v1309 = vpop.f32.mrb[0].mxu0
        %v1310 = vadd.f32 %v953, %v1309
        %v1311 = vpop.f32.mrb[0].mxu0
        %v1312 = vadd.f32 %v953, %v1311
        %1313 = vdwg.mxu0
        %1314 = vmatprep.subr.mxu0 %v927
        %1315 = vmatpush1.msra.mxu0 %v926
        %1316 = vmatprep.subr.mxu0 %v943
        %1317 = vmatpush1.msra.mxu0 %v942
        %1318 = vmatprep.subr.mxu0 0.0
        %1319 = vmatpush1.msra.mxu0 0.0
        %1320 = vmatprep.subr.mxu0 0.0
        %1321 = vmatpush1.msra.mxu0 0.0
        %1322 = vmatprep.subr.mxu0 0.0
        %1323 = vmatpush1.msra.mxu0 0.0
        %1324 = vmatprep.subr.mxu0 0.0
        %1325 = vmatpush1.msra.mxu0 0.0
        %1326 = vmatprep.subr.mxu0 0.0
        %1327 = vmatpush1.msra.mxu0 0.0
        %1328 = vmatprep.subr.mxu0 0.0
        %1329 = vmatpush1.msra.mxu0 0.0
        %1330 = vmatprep.subr.mxu0 0.0
        %1331 = vmatpush1.msra.mxu0 0.0
        %1332 = vmatprep.subr.mxu0 0.0
        %1333 = vmatpush1.msra.mxu0 0.0
        %1334 = vmatprep.subr.mxu0 0.0
        %1335 = vmatpush1.msra.mxu0 0.0
        %1336 = vmatprep.subr.mxu0 0.0
        %1337 = vmatpush1.msra.mxu0 0.0
        %1338 = vmatprep.subr.mxu0 0.0
        %1339 = vmatpush1.msra.mxu0 0.0
        %1340 = vmatprep.subr.mxu0 0.0
        %1341 = vmatpush1.msra.mxu0 0.0
        %1342 = vmatprep.subr.mxu0 0.0
        %1343 = vmatpush1.msra.mxu0 0.0
        %1344 = vmatprep.subr.mxu0 0.0
        %1345 = vmatpush1.msra.mxu0 0.0
        %1346 = vmatprep.subr.mxu0 0.0
        %1347 = vmatpush1.msra.mxu0 0.0
        %1348 = vmatprep.subr.mxu0 0.0
        %1349 = vmatpush1.msra.mxu0 0.0
        %1350 = vmatprep.subr.mxu0 0.0
        %1351 = vmatpush1.msra.mxu0 0.0
        %1352 = vmatprep.subr.mxu0 0.0
        %1353 = vmatpush1.msra.mxu0 0.0
        %1354 = vmatprep.subr.mxu0 0.0
        %1355 = vmatpush1.msra.mxu0 0.0
        %1356 = vmatprep.subr.mxu0 0.0
        %1357 = vmatpush1.msra.mxu0 0.0
        %1358 = vmatprep.subr.mxu0 0.0
        %1359 = vmatpush1.msra.mxu0 0.0
        %1360 = vmatprep.subr.mxu0 0.0
        %1361 = vmatpush1.msra.mxu0 0.0
        %1362 = vmatprep.subr.mxu0 0.0
        %1363 = vmatpush1.msra.mxu0 0.0
        %1364 = vmatprep.subr.mxu0 0.0
        %1365 = vmatpush1.msra.mxu0 0.0
        %1366 = vmatprep.subr.mxu0 0.0
        %1367 = vmatpush1.msra.mxu0 0.0
        %1368 = vmatprep.subr.mxu0 0.0
        %1369 = vmatpush1.msra.mxu0 0.0
        %1370 = vmatprep.subr.mxu0 0.0
        %1371 = vmatpush1.msra.mxu0 0.0
        %1372 = vmatprep.subr.mxu0 0.0
        %1373 = vmatpush1.msra.mxu0 0.0
        %1374 = vmatprep.subr.mxu0 0.0
        %1375 = vmatpush1.msra.mxu0 0.0
        %1376 = vmatprep.subr.mxu0 0.0
        %1377 = vmatpush1.msra.mxu0 0.0
        %1378 = vmatprep.mubr.f32.mxu0 0.0
        %1379 = vmatmul.mubr.f32.gmra.mrb[0].mxu0 %v957
        %v1380 = vpop.f32.mrb[0].mxu0
        %v1381 = vadd.f32 %v953, %v1380
        %v1382 = vpop.f32.mrb[0].mxu0
        %v1383 = vadd.f32 %v953, %v1382
        %1384 = vdwg.mxu0
        %1385 = vmatprep.subr.mxu0 %v929
        %1386 = vmatpush1.msra.mxu0 %v928
        %1387 = vmatprep.subr.mxu0 %v945
        %1388 = vmatpush1.msra.mxu0 %v944
        %1389 = vmatprep.subr.mxu0 0.0
        %1390 = vmatpush1.msra.mxu0 0.0
        %1391 = vmatprep.subr.mxu0 0.0
        %1392 = vmatpush1.msra.mxu0 0.0
        %1393 = vmatprep.subr.mxu0 0.0
        %1394 = vmatpush1.msra.mxu0 0.0
        %1395 = vmatprep.subr.mxu0 0.0
        %1396 = vmatpush1.msra.mxu0 0.0
        %1397 = vmatprep.subr.mxu0 0.0
        %1398 = vmatpush1.msra.mxu0 0.0
        %1399 = vmatprep.subr.mxu0 0.0
        %1400 = vmatpush1.msra.mxu0 0.0
        %1401 = vmatprep.subr.mxu0 0.0
        %1402 = vmatpush1.msra.mxu0 0.0
        %1403 = vmatprep.subr.mxu0 0.0
        %1404 = vmatpush1.msra.mxu0 0.0
        %1405 = vmatprep.subr.mxu0 0.0
        %1406 = vmatpush1.msra.mxu0 0.0
        %1407 = vmatprep.subr.mxu0 0.0
        %1408 = vmatpush1.msra.mxu0 0.0
        %1409 = vmatprep.subr.mxu0 0.0
        %1410 = vmatpush1.msra.mxu0 0.0
        %1411 = vmatprep.subr.mxu0 0.0
        %1412 = vmatpush1.msra.mxu0 0.0
        %1413 = vmatprep.subr.mxu0 0.0
        %1414 = vmatpush1.msra.mxu0 0.0
        %1415 = vmatprep.subr.mxu0 0.0
        %1416 = vmatpush1.msra.mxu0 0.0
        %1417 = vmatprep.subr.mxu0 0.0
        %1418 = vmatpush1.msra.mxu0 0.0
        %1419 = vmatprep.subr.mxu0 0.0
        %1420 = vmatpush1.msra.mxu0 0.0
        %1421 = vmatprep.subr.mxu0 0.0
        %1422 = vmatpush1.msra.mxu0 0.0
        %1423 = vmatprep.subr.mxu0 0.0
        %1424 = vmatpush1.msra.mxu0 0.0
        %1425 = vmatprep.subr.mxu0 0.0
        %1426 = vmatpush1.msra.mxu0 0.0
        %1427 = vmatprep.subr.mxu0 0.0
        %1428 = vmatpush1.msra.mxu0 0.0
        %1429 = vmatprep.subr.mxu0 0.0
        %1430 = vmatpush1.msra.mxu0 0.0
        %1431 = vmatprep.subr.mxu0 0.0
        %1432 = vmatpush1.msra.mxu0 0.0
        %1433 = vmatprep.subr.mxu0 0.0
        %1434 = vmatpush1.msra.mxu0 0.0
        %1435 = vmatprep.subr.mxu0 0.0
        %1436 = vmatpush1.msra.mxu0 0.0
        %1437 = vmatprep.subr.mxu0 0.0
        %1438 = vmatpush1.msra.mxu0 0.0
        %1439 = vmatprep.subr.mxu0 0.0
        %1440 = vmatpush1.msra.mxu0 0.0
        %1441 = vmatprep.subr.mxu0 0.0
        %1442 = vmatpush1.msra.mxu0 0.0
        %1443 = vmatprep.subr.mxu0 0.0
        %1444 = vmatpush1.msra.mxu0 0.0
        %1445 = vmatprep.subr.mxu0 0.0
        %1446 = vmatpush1.msra.mxu0 0.0
        %1447 = vmatprep.subr.mxu0 0.0
        %1448 = vmatpush1.msra.mxu0 0.0
        %1449 = vmatprep.mubr.f32.mxu0 0.0
        %1450 = vmatmul.mubr.f32.gmra.mrb[0].mxu0 %v957
        %v1451 = vpop.f32.mrb[0].mxu0
        %v1452 = vadd.f32 %v953, %v1451
        %v1453 = vpop.f32.mrb[0].mxu0
        %v1454 = vadd.f32 %v953, %v1453
        %1455 = vdwg.mxu0
        %1456 = vmatprep.subr.mxu0 %v931
        %1457 = vmatpush1.msra.mxu0 %v930
        %1458 = vmatprep.subr.mxu0 %v947
        %1459 = vmatpush1.msra.mxu0 %v946
        %1460 = vmatprep.subr.mxu0 0.0
        %1461 = vmatpush1.msra.mxu0 0.0
        %1462 = vmatprep.subr.mxu0 0.0
        %1463 = vmatpush1.msra.mxu0 0.0
        %1464 = vmatprep.subr.mxu0 0.0
        %1465 = vmatpush1.msra.mxu0 0.0
        %1466 = vmatprep.subr.mxu0 0.0
        %1467 = vmatpush1.msra.mxu0 0.0
        %1468 = vmatprep.subr.mxu0 0.0
        %1469 = vmatpush1.msra.mxu0 0.0
        %1470 = vmatprep.subr.mxu0 0.0
        %1471 = vmatpush1.msra.mxu0 0.0
        %1472 = vmatprep.subr.mxu0 0.0
        %1473 = vmatpush1.msra.mxu0 0.0
        %1474 = vmatprep.subr.mxu0 0.0
        %1475 = vmatpush1.msra.mxu0 0.0
        %1476 = vmatprep.subr.mxu0 0.0
        %1477 = vmatpush1.msra.mxu0 0.0
        %1478 = vmatprep.subr.mxu0 0.0
        %1479 = vmatpush1.msra.mxu0 0.0
        %1480 = vmatprep.subr.mxu0 0.0
        %1481 = vmatpush1.msra.mxu0 0.0
        %1482 = vmatprep.subr.mxu0 0.0
        %1483 = vmatpush1.msra.mxu0 0.0
        %1484 = vmatprep.subr.mxu0 0.0
        %1485 = vmatpush1.msra.mxu0 0.0
        %1486 = vmatprep.subr.mxu0 0.0
        %1487 = vmatpush1.msra.mxu0 0.0
        %1488 = vmatprep.subr.mxu0 0.0
        %1489 = vmatpush1.msra.mxu0 0.0
        %1490 = vmatprep.subr.mxu0 0.0
        %1491 = vmatpush1.msra.mxu0 0.0
        %1492 = vmatprep.subr.mxu0 0.0
        %1493 = vmatpush1.msra.mxu0 0.0
        %1494 = vmatprep.subr.mxu0 0.0
        %1495 = vmatpush1.msra.mxu0 0.0
        %1496 = vmatprep.subr.mxu0 0.0
        %1497 = vmatpush1.msra.mxu0 0.0
        %1498 = vmatprep.subr.mxu0 0.0
        %1499 = vmatpush1.msra.mxu0 0.0
        %1500 = vmatprep.subr.mxu0 0.0
        %1501 = vmatpush1.msra.mxu0 0.0
        %1502 = vmatprep.subr.mxu0 0.0
        %1503 = vmatpush1.msra.mxu0 0.0
        %1504 = vmatprep.subr.mxu0 0.0
        %1505 = vmatpush1.msra.mxu0 0.0
        %1506 = vmatprep.subr.mxu0 0.0
        %1507 = vmatpush1.msra.mxu0 0.0
        %1508 = vmatprep.subr.mxu0 0.0
        %1509 = vmatpush1.msra.mxu0 0.0
        %1510 = vmatprep.subr.mxu0 0.0
        %1511 = vmatpush1.msra.mxu0 0.0
        %1512 = vmatprep.subr.mxu0 0.0
        %1513 = vmatpush1.msra.mxu0 0.0
        %1514 = vmatprep.subr.mxu0 0.0
        %1515 = vmatpush1.msra.mxu0 0.0
        %1516 = vmatprep.subr.mxu0 0.0
        %1517 = vmatpush1.msra.mxu0 0.0
        %1518 = vmatprep.subr.mxu0 0.0
        %1519 = vmatpush1.msra.mxu0 0.0
        %1520 = vmatprep.mubr.f32.mxu0 0.0
        %1521 = vmatmul.mubr.f32.gmra.mrb[0].mxu0 %v957
        %v1522 = vpop.f32.mrb[0].mxu0
        %v1523 = vadd.f32 %v953, %v1522
        %v1524 = vpop.f32.mrb[0].mxu0
        %v1525 = vadd.f32 %v953, %v1524
        %1526 = vdwg.mxu0
        %v1527 = vpack.c.bf16 %v1026, %v1026
        %v1528 = vpack.c.bf16 %v1028, %v1028
        %v1529 = vpack.c.bf16 %v1097, %v1097
        %v1530 = vpack.c.bf16 %v1099, %v1099
        %v1531 = vpack.c.bf16 %v1168, %v1168
        %v1532 = vpack.c.bf16 %v1170, %v1170
        %v1533 = vpack.c.bf16 %v1239, %v1239
        %v1534 = vpack.c.bf16 %v1241, %v1241
        %v1535 = vpack.c.bf16 %v1310, %v1310
        %v1536 = vpack.c.bf16 %v1312, %v1312
        %v1537 = vpack.c.bf16 %v1381, %v1381
        %v1538 = vpack.c.bf16 %v1383, %v1383
        %v1539 = vpack.c.bf16 %v1452, %v1452
        %v1540 = vpack.c.bf16 %v1454, %v1454
        %v1541 = vpack.c.bf16 %v1523, %v1523
        %v1542 = vpack.c.bf16 %v1525, %v1525
        %v1559 = vcombine.low %v1527, %v1528
        %v1560 = vcombine.low %v1529, %v1530
        %v1562 = vunpack.c.l.s4 1983009808
        %v1563 = vunpack.c.0.s8 %v1562
        %v1564 = vlaneseq
        %v1565 = vshrl.u32 %v1564, 7
        %v1566 = vsub.s32 %v1563, %v1565
        %v1567 = vrot.slane %v1559, %v1566
        %v1569 = vunpack.c.l.s4 1983009808
        %v1570 = vunpack.c.0.s8 %v1569
        %v1571 = vlaneseq
        %v1572 = vshrl.u32 %v1571, 7
        %v1573 = vsub.s32 %v1570, %v1572
        %v1574 = vrot.slane %v1560, %v1573
        %v1575 = vcombine.low %v1567, %v1574
        %v1576 = vcombine.low %v1531, %v1532
        %v1577 = vcombine.low %v1533, %v1534
        %v1579 = vunpack.c.l.s4 1983009808
        %v1580 = vunpack.c.0.s8 %v1579
        %v1581 = vlaneseq
        %v1582 = vshrl.u32 %v1581, 7
        %v1583 = vsub.s32 %v1580, %v1582
        %v1584 = vrot.slane %v1576, %v1583
        %v1586 = vunpack.c.l.s4 1983009808
        %v1587 = vunpack.c.0.s8 %v1586
        %v1588 = vlaneseq
        %v1589 = vshrl.u32 %v1588, 7
        %v1590 = vsub.s32 %v1587, %v1589
        %v1591 = vrot.slane %v1577, %v1590
        %v1592 = vcombine.low %v1584, %v1591
        %v1593 = vcombine.low %v1535, %v1536
        %v1594 = vcombine.low %v1537, %v1538
        %v1596 = vunpack.c.l.s4 1983009808
        %v1597 = vunpack.c.0.s8 %v1596
        %v1598 = vlaneseq
        %v1599 = vshrl.u32 %v1598, 7
        %v1600 = vsub.s32 %v1597, %v1599
        %v1601 = vrot.slane %v1593, %v1600
        %v1603 = vunpack.c.l.s4 1983009808
        %v1604 = vunpack.c.0.s8 %v1603
        %v1605 = vlaneseq
        %v1606 = vshrl.u32 %v1605, 7
        %v1607 = vsub.s32 %v1604, %v1606
        %v1608 = vrot.slane %v1594, %v1607
        %v1609 = vcombine.low %v1601, %v1608
        %v1610 = vcombine.low %v1539, %v1540
        %v1611 = vcombine.low %v1541, %v1542
        %v1613 = vunpack.c.l.s4 1983009808
        %v1614 = vunpack.c.0.s8 %v1613
        %v1615 = vlaneseq
        %v1616 = vshrl.u32 %v1615, 7
        %v1617 = vsub.s32 %v1614, %v1616
        %v1618 = vrot.slane %v1610, %v1617
        %v1620 = vunpack.c.l.s4 1983009808
        %v1621 = vunpack.c.0.s8 %v1620
        %v1622 = vlaneseq
        %v1623 = vshrl.u32 %v1622, 7
        %v1624 = vsub.s32 %v1621, %v1623
        %v1625 = vrot.slane %v1611, %v1624
        %v1626 = vcombine.low %v1618, %v1625
        %vm1631 = vcmask 1041408
        %vm1632 = vsmask.f32 1280
        %vm1633 = vmand %vm1631, %vm1632
        %vm1634 = vcmask 1043458
        %vm1635 = vsmask.f32 3328
        %vm1636 = vmand %vm1634, %vm1635
        %vm1637 = vmor %vm1636, %vm1633
        %vm1638 = vcmask 1045508
        %vm1639 = vsmask.f32 5376
        %vm1640 = vmand %vm1638, %vm1639
        %vm1641 = vmor %vm1640, %vm1637
        %vm1642 = vcmask 1047558
        %vm1643 = vsmask.f32 7424
        %vm1644 = vmand %vm1642, %vm1643
        %vm1645 = vmor %vm1644, %vm1641
        %v1646 = vld [vmem:[%s242] sm:$0xff]
        %v1647 = vsel %vm1645, %v1575, %v1646
        %1648 = vst [vmem:[%s242] sm:$0xff] %v1647
        %v1649 = vld [vmem:[%s242 + $0x8] sm:$0xff]
        %v1650 = vsel %vm1645, %v1592, %v1649
        %1651 = vst [vmem:[%s242 + $0x8] sm:$0xff] %v1650
        %v1652 = vld [vmem:[%s242 + $0x10] sm:$0xff]
        %v1653 = vsel %vm1645, %v1609, %v1652
        %1654 = vst [vmem:[%s242 + $0x10] sm:$0xff] %v1653
        %v1655 = vld [vmem:[%s242 + $0x18] sm:$0xff]
        %v1656 = vsel %vm1645, %v1626, %v1655
        %1657 = vst [vmem:[%s242 + $0x18] sm:$0xff] %v1656
        %s1658 = sand.u32 %s140, 1
        %s1659 = scalar_lea.sflag [#allocation4], %s1658
        %s1660 = sand.u32 %s140, 1
        %s1661 = smul.addr %s1660, 32
        %s1662 = scalar_lea.vmem [#allocation5], %s1661
        // Predicated region
        $region45: #{tpu_custom_call.1} parent=39 // pred_check
          %p1663 = pneg %p150
        $region46: #{tpu_custom_call.1} parent=39 // pred_check_branch
          %1665 = sbr.rel (%p1663) target = $region48
        $region47: #{tpu_custom_call.1} parent=39 // pred_region
          %s1666 = smul.u32 16, %s22
          %s1668 = ssub.s32 512, 512
          %1669 = vsyncadd %s1659, %s1668
          %s1670 = smul.addr %s1666, 32
          %s1671 = scalar_lea.hbm %s5, %s1670
          %s1673 = sshll.u32 %s1662, 4
          %s1674 = int_to_ptr.vmem [resolvable:$true] %s1673
          %1676 = dma.vmem_to_hbm [thread:$0]  %s1674, 512, %s1671, %s1659
        $region48: #{tpu_custom_call.1} parent=39 // pred_fallthru
          _
      $region40: #{tpu_custom_call.1} parent=5 // pred_fallthru
        _
      %p1677 = scmp.le.s32.totalorder 2, %s17
      // Predicated region
      $region49: #{tpu_custom_call.1} parent=5 // pred_check
        %p1678 = pneg %p1677
      $region50: #{tpu_custom_call.1} parent=5 // pred_check_branch
        %1680 = sbr.rel (%p1678) target = $region52
      $region51: #{tpu_custom_call.1} parent=5 // pred_region
        %s1681 = ssub.s32 %s17, 2
        // Predicated region
        $region53: #{tpu_custom_call.1} parent=51 // pred_check
          %p1682 = pneg %p156
        $region54: #{tpu_custom_call.1} parent=51 // pred_check_branch
          %1684 = sbr.rel (%p1682) target = $region56
        $region55: #{tpu_custom_call.1} parent=51 // pred_region
          %s1685 = sand.u32 %s141, 1
          %s1686 = scalar_lea.sflag [#allocation4], %s1685
          %s1687 = sand.u32 %s141, 1
          %s1688 = smul.addr %s1687, 32
          %s1689 = scalar_lea.vmem [#allocation5], %s1688
          %1690 = dma.done %s1686, 512
        $region56: #{tpu_custom_call.1} parent=51 // pred_fallthru
          _
      $region52: #{tpu_custom_call.1} parent=5 // pred_fallthru
        _
    $region6: #{tpu_custom_call.1} parent=1 // loop_footer
      %s21 = sadd.s32 1, %s17
    $region7: #{tpu_custom_call.1} parent=1 // loop_footer_branch
      %16 = sbr.rel target = $region3
    $region8: #{tpu_custom_call.1} parent=1 // loop_exit
      _
    %1691 = vsyncpa [#allocation3], 1
    %s1692 = scalar_lea.sflag [#allocation3], 1
    %1693 = vsyncpa %s1692, 1
    %1694 = vsyncpa [#allocation4], 1
    %s1695 = scalar_lea.sflag [#allocation4], 1
    %1696 = vsyncpa %s1695, 1

</llo_original>
